<compile_context>
chip_gen: v7x
topology: tpu7x:2x2x1
jax: 0.10.0
libtpu: 0.0.40
codegen_flags: <defaults>
</compile_context>

<pallas_src>
import math
import numpy as np
import jax
import jax.numpy as jnp
from jax.experimental import pallas as pl

# ----------------------- small synthetic Llama config -----------------------
B, T = 2, 8          # batch, sequence
VOCAB = 256          # vocab size
D = 64               # hidden size
H = 4                # attention heads (no GQA: kv heads == heads)
HD = D // H          # head dim
FFN = 128            # intermediate size
LAYERS = 2
EPS = 1e-6           # rms_norm_eps
ROPE_THETA = 10000.0
SCALE = 1.0 / math.sqrt(HD)

N = B * T            # flattened tokens processed per forward
SN = H * N           # head-major stacked rows used inside attention


# --------------------------- fused Pallas kernel -----------------------------
def fused_llama_kernel(h_ref, cos2_ref, sin2_ref, bias_ref,
                       ln1_ref, wqkv_ref, wo_ref,
                       ln2_ref, wgu_ref, wd_ref,
                       lnf_ref, wlm_ref, o_ref):
    """Full Llama forward for the flattened (B*T, D) hidden state; everything
    stays VMEM/vreg resident, only the lane-dense (16, 256) logits tile is
    written back."""
    f32, bf16 = jnp.float32, jnp.bfloat16

    x = h_ref[...]                        # (N, D)   f32 residual stream
    cos2 = cos2_ref[...]                  # (N, 2D)  RoPE cos for [q | k] slab
    sin2 = sin2_ref[...]                  # (N, 2D)
    bias = bias_ref[...]                  # (SN, SN) 0 / -1e30 additive mask

    def rms(v, w):                        # RMSNorm, statistics in f32
        var = jnp.mean(v * v, axis=-1, keepdims=True)
        return v * jax.lax.rsqrt(var + EPS) * w

    def split_heads(m):                   # (N, D) -> (H*N, HD), head-major rows
        return jnp.concatenate(
            [m[:, hh * HD:(hh + 1) * HD] for hh in range(H)], axis=0)

    for l in range(LAYERS):               # static unroll (LAYERS = 2)
        # ------------------ attention block ------------------
        xn16 = rms(x, ln1_ref[l]).astype(bf16)
        # ONE fused projection: columns are [Q | K | Q@R | K@R | V] where R is
        # the rotate_half signed permutation folded into the weights host-side.
        qkv = jnp.dot(xn16, wqkv_ref[l], preferred_element_type=f32)  # (N, 5D)
        # RoPE: pure elementwise FMA on the 128-lane [q|k] slab (no matmul).
        qk = qkv[:, :2 * D] * cos2 + qkv[:, 2 * D:4 * D] * sin2
        qk16 = qk.astype(bf16)
        v16 = qkv[:, 4 * D:].astype(bf16)

        # Heads stacked along sublanes -> two plain 2-D MXU matmuls.  The
        # cross-head / cross-batch / non-causal score entries are driven to
        # exact zero probability by the additive bias, so they contribute
        # nothing to the context accumulation.
        q_s = split_heads(qk16[:, :D])          # (SN, HD) bf16
        k_s = split_heads(qk16[:, D:])          # (SN, HD) bf16
        v_s = split_heads(v16)                  # (SN, HD) bf16

        s = jax.lax.dot_general(q_s, k_s, (((1,), (1,)), ((), ())),
                                preferred_element_type=f32) * SCALE   # (SN, SN)
        s = s + bias
        s = s - jnp.max(s, axis=-1, keepdims=True)
        p = jnp.exp(s)
        p = p / jnp.sum(p, axis=-1, keepdims=True)
        ctx = jnp.dot(p.astype(bf16), v_s, preferred_element_type=f32)  # (SN, HD)
        attn = jnp.concatenate(
            [ctx[hh * N:(hh + 1) * N, :] for hh in range(H)], axis=-1)  # (N, D)
        x = x + jnp.dot(attn.astype(bf16), wo_ref[l],
                        preferred_element_type=f32)

        # ------------------ SwiGLU MLP block ------------------
        hn16 = rms(x, ln2_ref[l]).astype(bf16)
        gu = jnp.dot(hn16, wgu_ref[l], preferred_element_type=f32)      # (N, 2F)
        g, u = gu[:, :FFN], gu[:, FFN:]
        act = (g * (1.0 / (1.0 + jnp.exp(-g))) * u).astype(bf16)        # SiLU*u
        x = x + jnp.dot(act, wd_ref[l], preferred_element_type=f32)

    # -------- final RMSNorm + lm_head (lane-dense 256-wide store) --------
    xn16 = rms(x, lnf_ref[...]).astype(bf16)
    o_ref[...] = jnp.dot(xn16, wlm_ref[...], preferred_element_type=f32)


# --------------------------- pallas_call wrapper -----------------------------
def llama_forward_pallas(tokens, params, wqkv, wgu, cos2, sin2, bias):
    """Matches LlamaModel.forward(x): returns (logits, loss, past_key_values)."""
    # TODO(synk): embedding gather stays in plain JAX (data-dependent row gather).
    h = jnp.take(params['embed'], tokens.reshape(-1), axis=0).astype(jnp.float32)

    args = (h, cos2, sin2, bias,
            params['ln1'], wqkv, params['wo'],
            params['ln2'], wgu, params['wd'],
            params['lnf'], params['wlm'])

    # advisory cost hint for XLA scheduling
    flops_layer = (2 * N * D * (5 * D)            # fused qkv(+rot) projection
                   + 2 * (2 * SN * SN * HD)       # scores + p@v
                   + 2 * N * D * D                # output projection
                   + 2 * N * D * (2 * FFN)        # fused gate/up
                   + 2 * N * FFN * D)             # down projection
    flops = LAYERS * flops_layer + 2 * N * D * VOCAB
    transcendentals = LAYERS * (SN * SN + N * FFN + 2 * N) + N
    bytes_accessed = (sum(int(a.size) * a.dtype.itemsize for a in args)
                      + N * VOCAB * 4)

    logits = pl.pallas_call(
        fused_llama_kernel,
        out_shape=jax.ShapeDtypeStruct((N, VOCAB), jnp.float32),
        cost_estimate=pl.CostEstimate(flops=flops,
                                      transcendentals=transcendentals,
                                      bytes_accessed=bytes_accessed),
    )(*args)
    # forward() returns (logits, loss, past_key_values); targets=None -> loss None
    # TODO(synk): KV cache (past_key_values) not materialized; use_cache=False path.
    return logits.reshape(B, T, VOCAB), None, None


# --------------------------- pure-JAX reference ------------------------------
def _rms_ref(x, w):
    return x * jax.lax.rsqrt(jnp.mean(x * x, axis=-1, keepdims=True) + EPS) * w


def _rotate_half_heads(x):              # classic per-head rotate_half, f32
    t = x.shape[0]
    x3 = x.reshape(t, H, HD)
    h2 = HD // 2
    r = jnp.concatenate([-x3[..., h2:], x3[..., :h2]], axis=-1)
    return r.reshape(t, D)


def llama_forward_ref(tokens, params, cos_full, sin_full):
    bf = lambda a: a.astype(jnp.bfloat16)
    f32 = jnp.float32
    h = jnp.take(params['embed'], tokens, axis=0).astype(f32)    # (B, T, D)
    causal = np.tril(np.ones((T, T), dtype=bool))
    for l in range(LAYERS):
        outs = []
        for b in range(B):
            x = h[b]
            xn16 = bf(_rms_ref(x, params['ln1'][l]))
            q = jnp.dot(xn16, params['wq'][l], preferred_element_type=f32)
            k = jnp.dot(xn16, params['wk'][l], preferred_element_type=f32)
            v = jnp.dot(xn16, params['wv'][l], preferred_element_type=f32)
            q = q * cos_full + _rotate_half_heads(q) * sin_full
            k = k * cos_full + _rotate_half_heads(k) * sin_full
            heads = []
            for hh in range(H):
                sl = slice(hh * HD, (hh + 1) * HD)
                s = jnp.dot(bf(q[:, sl]), bf(k[:, sl]).T,
                            preferred_element_type=f32) * SCALE
                s = jnp.where(causal, s, -1e30)
                s = s - jnp.max(s, axis=-1, keepdims=True)
                p = jnp.exp(s)
                p = p / jnp.sum(p, axis=-1, keepdims=True)
                heads.append(jnp.dot(bf(p), bf(v[:, sl]),
                                     preferred_element_type=f32))
            attn = jnp.concatenate(heads, axis=-1)
            h1 = x + jnp.dot(bf(attn), params['wo'][l],
                             preferred_element_type=f32)
            hn16 = bf(_rms_ref(h1, params['ln2'][l]))
            g = jnp.dot(hn16, params['wg'][l], preferred_element_type=f32)
            u = jnp.dot(hn16, params['wu'][l], preferred_element_type=f32)
            act = bf(g * (1.0 / (1.0 + jnp.exp(-g))) * u)
            outs.append(h1 + jnp.dot(act, params['wd'][l],
                                     preferred_element_type=f32))
        h = jnp.stack(outs, axis=0)
    xn16 = bf(_rms_ref(h, params['lnf']))
    return jnp.dot(xn16, params['wlm'], preferred_element_type=f32)


# --------------------------- parameter / constant init -----------------------
def init_params(key):
    ks = jax.random.split(key, 9)

    def w(k, shape):
        return (0.02 * jax.random.normal(k, shape, jnp.float32)).astype(jnp.bfloat16)

    return {
        'embed': 0.02 * jax.random.normal(ks[0], (VOCAB, D), jnp.float32),
        'ln1': jnp.ones((LAYERS, 1, D), jnp.float32),
        'ln2': jnp.ones((LAYERS, 1, D), jnp.float32),
        'wq': w(ks[1], (LAYERS, D, D)),
        'wk': w(ks[2], (LAYERS, D, D)),
        'wv': w(ks[3], (LAYERS, D, D)),
        'wo': w(ks[4], (LAYERS, D, D)),
        'wg': w(ks[5], (LAYERS, D, FFN)),
        'wu': w(ks[6], (LAYERS, D, FFN)),
        'wd': w(ks[7], (LAYERS, FFN, D)),
        'lnf': jnp.ones((1, D), jnp.float32),
        'wlm': w(ks[8], (D, VOCAB)),
    }


def _rotate_half_perm_sign():
    """rotate_half as a signed column permutation (exact in bf16)."""
    perm = np.zeros(D, np.int32)
    sign = np.zeros(D, np.float32)
    h2 = HD // 2
    for hh in range(H):
        base = hh * HD
        for i in range(h2):
            perm[base + i] = base + i + h2; sign[base + i] = -1.0   # -x[i+h2]
            perm[base + i + h2] = base + i; sign[base + i + h2] = 1.0  # x[i]
    return jnp.asarray(perm), jnp.asarray(sign)


def pack_weights(params):
    """Pack [Wq | Wk | Wq@R | Wk@R | Wv] (D,5D) and [Wg | Wu] (D,2F) host-side
    so the kernel needs one matmul per projection group and RoPE is pure VPU."""
    perm, sign = _rotate_half_perm_sign()
    wq, wk, wv = params['wq'], params['wk'], params['wv']
    wq_rot = (wq[..., perm] * sign).astype(jnp.bfloat16)   # exact +-column perm
    wk_rot = (wk[..., perm] * sign).astype(jnp.bfloat16)
    wqkv = jnp.concatenate([wq, wk, wq_rot, wk_rot, wv], axis=-1)  # (L, D, 5D)
    wgu = jnp.concatenate([params['wg'], params['wu']], axis=-1)   # (L, D, 2F)
    return wqkv, wgu


def make_rope(seq_len):
    pos = jnp.arange(seq_len, dtype=jnp.float32)
    inv_freq = 1.0 / (ROPE_THETA ** (jnp.arange(0, HD, 2, dtype=jnp.float32) / HD))
    freqs = jnp.outer(pos, inv_freq)                        # (T, HD/2)
    emb = jnp.concatenate([freqs, freqs], axis=-1)          # (T, HD)
    cos, sin = jnp.cos(emb), jnp.sin(emb)
    return jnp.tile(cos, (1, H)), jnp.tile(sin, (1, H))     # (T, D) each


def make_rope_flat(cos, sin):
    """Batch-flattened, [q|k]-slab-doubled cos/sin of shape (B*T, 2D)."""
    cosf = jnp.tile(cos, (B, 1))
    sinf = jnp.tile(sin, (B, 1))
    return (jnp.concatenate([cosf, cosf], axis=-1),
            jnp.concatenate([sinf, sinf], axis=-1))


def make_attn_bias():
    """(head, batch)-block-diagonal causal additive bias for stacked rows."""
    idx = np.arange(SN)
    head = idx // N
    tok = idx % N
    bat = tok // T
    allowed = ((head[:, None] == head[None, :])
               & (bat[:, None] == bat[None, :])
               & (tok[:, None] >= tok[None, :]))
    return jnp.asarray(np.where(allowed, 0.0, -1e30).astype(np.float32))


# ------------------------------- main ----------------------------------------
if __name__ == "__main__":
    key = jax.random.PRNGKey(0)
    pkey, tkey = jax.random.split(key)
    params = init_params(pkey)
    cos, sin = make_rope(T)
    cos2, sin2 = make_rope_flat(cos, sin)
    wqkv, wgu = pack_weights(params)
    bias = make_attn_bias()
    tokens = jax.random.randint(tkey, (B, T), 0, VOCAB, dtype=jnp.int32)

    fwd = jax.jit(llama_forward_pallas)
    logits, loss, past = fwd(tokens, params, wqkv, wgu, cos2, sin2, bias)
    logits = jax.block_until_ready(logits)

    ref = jax.block_until_ready(llama_forward_ref(tokens, params, cos, sin))
    assert logits.shape == (B, T, VOCAB)
    np.testing.assert_allclose(np.asarray(logits), np.asarray(ref),
                               rtol=2e-2, atol=2e-3)
    print("KERNEL_OK")
</pallas_src>

<mosaic_0001>
module attributes {stable_mosaic.version = 11 : i64} {
  func.func @fused_llama_kernel(%arg0: memref<16x64xf32, #tpu.memory_space<vmem>>, %arg1: memref<16x128xf32, #tpu.memory_space<vmem>>, %arg2: memref<16x128xf32, #tpu.memory_space<vmem>>, %arg3: memref<64x64xf32, #tpu.memory_space<vmem>>, %arg4: memref<2x1x64xf32, #tpu.memory_space<vmem>>, %arg5: memref<2x64x320xbf16, #tpu.memory_space<vmem>>, %arg6: memref<2x64x64xbf16, #tpu.memory_space<vmem>>, %arg7: memref<2x1x64xf32, #tpu.memory_space<vmem>>, %arg8: memref<2x64x256xbf16, #tpu.memory_space<vmem>>, %arg9: memref<2x128x64xbf16, #tpu.memory_space<vmem>>, %arg10: memref<1x64xf32, #tpu.memory_space<vmem>>, %arg11: memref<64x256xbf16, #tpu.memory_space<vmem>>, %arg12: memref<16x256xf32, #tpu.memory_space<vmem>>) attributes {dimension_semantics = [], scalar_prefetch = 0 : i64, scratch_operands = 0 : i64, tpu.core_type = #tpu.core_type<tc>} {
    %c0 = arith.constant 0 : index
    %c0_0 = arith.constant 0 : index
    %0 = vector.load %arg0[%c0, %c0_0] : memref<16x64xf32, #tpu.memory_space<vmem>>, vector<16x64xf32>
    %c0_1 = arith.constant 0 : index
    %c0_2 = arith.constant 0 : index
    %1 = vector.load %arg1[%c0_1, %c0_2] : memref<16x128xf32, #tpu.memory_space<vmem>>, vector<16x128xf32>
    %c0_3 = arith.constant 0 : index
    %c0_4 = arith.constant 0 : index
    %2 = vector.load %arg2[%c0_3, %c0_4] : memref<16x128xf32, #tpu.memory_space<vmem>>, vector<16x128xf32>
    %c0_5 = arith.constant 0 : index
    %c0_6 = arith.constant 0 : index
    %3 = vector.load %arg3[%c0_5, %c0_6] : memref<64x64xf32, #tpu.memory_space<vmem>>, vector<64x64xf32>
    %c0_7 = arith.constant 0 : index
    %c0_8 = arith.constant 0 : index
    %c0_9 = arith.constant 0 : index
    %4 = vector.load %arg4[%c0_7, %c0_8, %c0_9] : memref<2x1x64xf32, #tpu.memory_space<vmem>>, vector<1x1x64xf32>
    %5 = vector.shape_cast %4 : vector<1x1x64xf32> to vector<1x64xf32>
    %6 = arith.mulf %0, %0 : vector<16x64xf32>
    %cst = arith.constant dense<0.000000e+00> : vector<16xf32>
    %7 = vector.multi_reduction <add>, %6, %cst [1] : vector<16x64xf32> to vector<16xf32>
    %8 = vector.shape_cast %7 : vector<16xf32> to vector<16x1xf32>
    %cst_10 = arith.constant 6.400000e+01 : f32
    %9 = vector.broadcast %cst_10 : f32 to vector<16x1xf32>
    %10 = arith.divf %8, %9 : vector<16x1xf32>
    %cst_11 = arith.constant 9.99999997E-7 : f32
    %11 = vector.broadcast %cst_11 : f32 to vector<16x1xf32>
    %12 = arith.addf %10, %11 : vector<16x1xf32>
    %13 = math.rsqrt %12 : vector<16x1xf32>
    %14 = vector.broadcast %13 : vector<16x1xf32> to vector<16x64xf32>
    %15 = arith.mulf %0, %14 : vector<16x64xf32>
    %16 = vector.broadcast %5 : vector<1x64xf32> to vector<16x64xf32>
    %17 = arith.mulf %15, %16 : vector<16x64xf32>
    %18 = arith.truncf %17 : vector<16x64xf32> to vector<16x64xbf16>
    %c0_12 = arith.constant 0 : index
    %c0_13 = arith.constant 0 : index
    %c0_14 = arith.constant 0 : index
    %19 = vector.load %arg5[%c0_12, %c0_13, %c0_14] : memref<2x64x320xbf16, #tpu.memory_space<vmem>>, vector<1x64x320xbf16>
    %20 = vector.shape_cast %19 : vector<1x64x320xbf16> to vector<64x320xbf16>
    %cst_15 = arith.constant dense<0.000000e+00> : vector<16x320xf32>
    %21 = tpu.matmul %18, %20, %cst_15 {dimension_numbers = #tpu.dot_dimension_numbers<[1], [0], [0], [1], [0, 0, 1, 1], [], []>} : vector<16x64xbf16>, vector<64x320xbf16>, vector<16x320xf32> -> vector<16x320xf32>
    %22 = vector.extract_strided_slice %21 {offsets = [0, 0], sizes = [16, 128], strides = [1, 1]} : vector<16x320xf32> to vector<16x128xf32>
    %23 = arith.mulf %22, %1 : vector<16x128xf32>
    %24 = vector.extract_strided_slice %21 {offsets = [0, 128], sizes = [16, 128], strides = [1, 1]} : vector<16x320xf32> to vector<16x128xf32>
    %25 = arith.mulf %24, %2 : vector<16x128xf32>
    %26 = arith.addf %23, %25 : vector<16x128xf32>
    %27 = arith.truncf %26 : vector<16x128xf32> to vector<16x128xbf16>
    %28 = vector.extract_strided_slice %21 {offsets = [0, 256], sizes = [16, 64], strides = [1, 1]} : vector<16x320xf32> to vector<16x64xf32>
    %29 = arith.truncf %28 : vector<16x64xf32> to vector<16x64xbf16>
    %30 = vector.extract_strided_slice %27 {offsets = [0, 0], sizes = [16, 64], strides = [1, 1]} : vector<16x128xbf16> to vector<16x64xbf16>
    %31 = vector.extract_strided_slice %30 {offsets = [0, 0], sizes = [16, 16], strides = [1, 1]} : vector<16x64xbf16> to vector<16x16xbf16>
    %32 = vector.extract_strided_slice %30 {offsets = [0, 16], sizes = [16, 16], strides = [1, 1]} : vector<16x64xbf16> to vector<16x16xbf16>
    %33 = vector.extract_strided_slice %30 {offsets = [0, 32], sizes = [16, 16], strides = [1, 1]} : vector<16x64xbf16> to vector<16x16xbf16>
    %34 = vector.extract_strided_slice %30 {offsets = [0, 48], sizes = [16, 16], strides = [1, 1]} : vector<16x64xbf16> to vector<16x16xbf16>
    %35 = tpu.concatenate %31, %32, %33, %34 in 0 : vector<16x16xbf16>, vector<16x16xbf16>, vector<16x16xbf16>, vector<16x16xbf16> -> vector<64x16xbf16>
    %36 = vector.extract_strided_slice %27 {offsets = [0, 64], sizes = [16, 64], strides = [1, 1]} : vector<16x128xbf16> to vector<16x64xbf16>
    %37 = vector.extract_strided_slice %36 {offsets = [0, 0], sizes = [16, 16], strides = [1, 1]} : vector<16x64xbf16> to vector<16x16xbf16>
    %38 = vector.extract_strided_slice %36 {offsets = [0, 16], sizes = [16, 16], strides = [1, 1]} : vector<16x64xbf16> to vector<16x16xbf16>
    %39 = vector.extract_strided_slice %36 {offsets = [0, 32], sizes = [16, 16], strides = [1, 1]} : vector<16x64xbf16> to vector<16x16xbf16>
    %40 = vector.extract_strided_slice %36 {offsets = [0, 48], sizes = [16, 16], strides = [1, 1]} : vector<16x64xbf16> to vector<16x16xbf16>
    %41 = tpu.concatenate %37, %38, %39, %40 in 0 : vector<16x16xbf16>, vector<16x16xbf16>, vector<16x16xbf16>, vector<16x16xbf16> -> vector<64x16xbf16>
    %42 = vector.extract_strided_slice %29 {offsets = [0, 0], sizes = [16, 16], strides = [1, 1]} : vector<16x64xbf16> to vector<16x16xbf16>
    %43 = vector.extract_strided_slice %29 {offsets = [0, 16], sizes = [16, 16], strides = [1, 1]} : vector<16x64xbf16> to vector<16x16xbf16>
    %44 = vector.extract_strided_slice %29 {offsets = [0, 32], sizes = [16, 16], strides = [1, 1]} : vector<16x64xbf16> to vector<16x16xbf16>
    %45 = vector.extract_strided_slice %29 {offsets = [0, 48], sizes = [16, 16], strides = [1, 1]} : vector<16x64xbf16> to vector<16x16xbf16>
    %46 = tpu.concatenate %42, %43, %44, %45 in 0 : vector<16x16xbf16>, vector<16x16xbf16>, vector<16x16xbf16>, vector<16x16xbf16> -> vector<64x16xbf16>
    %cst_16 = arith.constant dense<0.000000e+00> : vector<64x64xf32>
    %47 = tpu.matmul %35, %41, %cst_16 {dimension_numbers = #tpu.dot_dimension_numbers<[1], [1], [0], [0], [0, 0, 1, 0], [], []>} : vector<64x16xbf16>, vector<64x16xbf16>, vector<64x64xf32> -> vector<64x64xf32>
    %cst_17 = arith.constant 2.500000e-01 : f32
    %48 = vector.broadcast %cst_17 : f32 to vector<64x64xf32>
    %49 = arith.mulf %47, %48 : vector<64x64xf32>
    %50 = arith.addf %49, %3 : vector<64x64xf32>
    %cst_18 = arith.constant dense<0xFF800000> : vector<64xf32>
    %51 = vector.multi_reduction <maximumf>, %50, %cst_18 [1] : vector<64x64xf32> to vector<64xf32>
    %52 = vector.shape_cast %51 : vector<64xf32> to vector<64x1xf32>
    %53 = vector.broadcast %52 : vector<64x1xf32> to vector<64x64xf32>
    %54 = arith.subf %50, %53 : vector<64x64xf32>
    %55 = math.exp %54 : vector<64x64xf32>
    %cst_19 = arith.constant dense<0.000000e+00> : vector<64xf32>
    %56 = vector.multi_reduction <add>, %55, %cst_19 [1] : vector<64x64xf32> to vector<64xf32>
    %57 = vector.shape_cast %56 : vector<64xf32> to vector<64x1xf32>
    %58 = vector.broadcast %57 : vector<64x1xf32> to vector<64x64xf32>
    %59 = arith.divf %55, %58 : vector<64x64xf32>
    %60 = arith.truncf %59 : vector<64x64xf32> to vector<64x64xbf16>
    %cst_20 = arith.constant dense<0.000000e+00> : vector<64x16xf32>
    %61 = tpu.matmul %60, %46, %cst_20 {dimension_numbers = #tpu.dot_dimension_numbers<[1], [0], [0], [1], [0, 0, 1, 1], [], []>} : vector<64x64xbf16>, vector<64x16xbf16>, vector<64x16xf32> -> vector<64x16xf32>
    %62 = vector.extract_strided_slice %61 {offsets = [0, 0], sizes = [16, 16], strides = [1, 1]} : vector<64x16xf32> to vector<16x16xf32>
    %63 = vector.extract_strided_slice %61 {offsets = [16, 0], sizes = [16, 16], strides = [1, 1]} : vector<64x16xf32> to vector<16x16xf32>
    %64 = vector.extract_strided_slice %61 {offsets = [32, 0], sizes = [16, 16], strides = [1, 1]} : vector<64x16xf32> to vector<16x16xf32>
    %65 = vector.extract_strided_slice %61 {offsets = [48, 0], sizes = [16, 16], strides = [1, 1]} : vector<64x16xf32> to vector<16x16xf32>
    %66 = tpu.concatenate %62, %63, %64, %65 in 1 : vector<16x16xf32>, vector<16x16xf32>, vector<16x16xf32>, vector<16x16xf32> -> vector<16x64xf32>
    %67 = arith.truncf %66 : vector<16x64xf32> to vector<16x64xbf16>
    %c0_21 = arith.constant 0 : index
    %c0_22 = arith.constant 0 : index
    %c0_23 = arith.constant 0 : index
    %68 = vector.load %arg6[%c0_21, %c0_22, %c0_23] : memref<2x64x64xbf16, #tpu.memory_space<vmem>>, vector<1x64x64xbf16>
    %69 = vector.shape_cast %68 : vector<1x64x64xbf16> to vector<64x64xbf16>
    %cst_24 = arith.constant dense<0.000000e+00> : vector<16x64xf32>
    %70 = tpu.matmul %67, %69, %cst_24 {dimension_numbers = #tpu.dot_dimension_numbers<[1], [0], [0], [1], [0, 0, 1, 1], [], []>} : vector<16x64xbf16>, vector<64x64xbf16>, vector<16x64xf32> -> vector<16x64xf32>
    %71 = arith.addf %0, %70 : vector<16x64xf32>
    %c0_25 = arith.constant 0 : index
    %c0_26 = arith.constant 0 : index
    %c0_27 = arith.constant 0 : index
    %72 = vector.load %arg7[%c0_25, %c0_26, %c0_27] : memref<2x1x64xf32, #tpu.memory_space<vmem>>, vector<1x1x64xf32>
    %73 = vector.shape_cast %72 : vector<1x1x64xf32> to vector<1x64xf32>
    %74 = arith.mulf %71, %71 : vector<16x64xf32>
    %cst_28 = arith.constant dense<0.000000e+00> : vector<16xf32>
    %75 = vector.multi_reduction <add>, %74, %cst_28 [1] : vector<16x64xf32> to vector<16xf32>
    %76 = vector.shape_cast %75 : vector<16xf32> to vector<16x1xf32>
    %cst_29 = arith.constant 6.400000e+01 : f32
    %77 = vector.broadcast %cst_29 : f32 to vector<16x1xf32>
    %78 = arith.divf %76, %77 : vector<16x1xf32>
    %cst_30 = arith.constant 9.99999997E-7 : f32
    %79 = vector.broadcast %cst_30 : f32 to vector<16x1xf32>
    %80 = arith.addf %78, %79 : vector<16x1xf32>
    %81 = math.rsqrt %80 : vector<16x1xf32>
    %82 = vector.broadcast %81 : vector<16x1xf32> to vector<16x64xf32>
    %83 = arith.mulf %71, %82 : vector<16x64xf32>
    %84 = vector.broadcast %73 : vector<1x64xf32> to vector<16x64xf32>
    %85 = arith.mulf %83, %84 : vector<16x64xf32>
    %86 = arith.truncf %85 : vector<16x64xf32> to vector<16x64xbf16>
    %c0_31 = arith.constant 0 : index
    %c0_32 = arith.constant 0 : index
    %c0_33 = arith.constant 0 : index
    %87 = vector.load %arg8[%c0_31, %c0_32, %c0_33] : memref<2x64x256xbf16, #tpu.memory_space<vmem>>, vector<1x64x256xbf16>
    %88 = vector.shape_cast %87 : vector<1x64x256xbf16> to vector<64x256xbf16>
    %cst_34 = arith.constant dense<0.000000e+00> : vector<16x256xf32>
    %89 = tpu.matmul %86, %88, %cst_34 {dimension_numbers = #tpu.dot_dimension_numbers<[1], [0], [0], [1], [0, 0, 1, 1], [], []>} : vector<16x64xbf16>, vector<64x256xbf16>, vector<16x256xf32> -> vector<16x256xf32>
    %90 = vector.extract_strided_slice %89 {offsets = [0, 0], sizes = [16, 128], strides = [1, 1]} : vector<16x256xf32> to vector<16x128xf32>
    %91 = vector.extract_strided_slice %89 {offsets = [0, 128], sizes = [16, 128], strides = [1, 1]} : vector<16x256xf32> to vector<16x128xf32>
    %cst_35 = arith.constant 0.000000e+00 : f32
    %92 = vector.broadcast %cst_35 : f32 to vector<16x128xf32>
    %93 = arith.subf %92, %90 : vector<16x128xf32>
    %94 = math.exp %93 : vector<16x128xf32>
    %cst_36 = arith.constant 1.000000e+00 : f32
    %95 = vector.broadcast %cst_36 : f32 to vector<16x128xf32>
    %96 = arith.addf %95, %94 : vector<16x128xf32>
    %cst_37 = arith.constant 1.000000e+00 : f32
    %97 = vector.broadcast %cst_37 : f32 to vector<16x128xf32>
    %98 = arith.divf %97, %96 : vector<16x128xf32>
    %99 = arith.mulf %90, %98 : vector<16x128xf32>
    %100 = arith.mulf %99, %91 : vector<16x128xf32>
    %101 = arith.truncf %100 : vector<16x128xf32> to vector<16x128xbf16>
    %c0_38 = arith.constant 0 : index
    %c0_39 = arith.constant 0 : index
    %c0_40 = arith.constant 0 : index
    %102 = vector.load %arg9[%c0_38, %c0_39, %c0_40] : memref<2x128x64xbf16, #tpu.memory_space<vmem>>, vector<1x128x64xbf16>
    %103 = vector.shape_cast %102 : vector<1x128x64xbf16> to vector<128x64xbf16>
    %cst_41 = arith.constant dense<0.000000e+00> : vector<16x64xf32>
    %104 = tpu.matmul %101, %103, %cst_41 {dimension_numbers = #tpu.dot_dimension_numbers<[1], [0], [0], [1], [0, 0, 1, 1], [], []>} : vector<16x128xbf16>, vector<128x64xbf16>, vector<16x64xf32> -> vector<16x64xf32>
    %105 = arith.addf %71, %104 : vector<16x64xf32>
    %c1 = arith.constant 1 : index
    %c0_42 = arith.constant 0 : index
    %c0_43 = arith.constant 0 : index
    %106 = vector.load %arg4[%c1, %c0_42, %c0_43] : memref<2x1x64xf32, #tpu.memory_space<vmem>>, vector<1x1x64xf32>
    %107 = vector.shape_cast %106 : vector<1x1x64xf32> to vector<1x64xf32>
    %108 = arith.mulf %105, %105 : vector<16x64xf32>
    %cst_44 = arith.constant dense<0.000000e+00> : vector<16xf32>
    %109 = vector.multi_reduction <add>, %108, %cst_44 [1] : vector<16x64xf32> to vector<16xf32>
    %110 = vector.shape_cast %109 : vector<16xf32> to vector<16x1xf32>
    %cst_45 = arith.constant 6.400000e+01 : f32
    %111 = vector.broadcast %cst_45 : f32 to vector<16x1xf32>
    %112 = arith.divf %110, %111 : vector<16x1xf32>
    %cst_46 = arith.constant 9.99999997E-7 : f32
    %113 = vector.broadcast %cst_46 : f32 to vector<16x1xf32>
    %114 = arith.addf %112, %113 : vector<16x1xf32>
    %115 = math.rsqrt %114 : vector<16x1xf32>
    %116 = vector.broadcast %115 : vector<16x1xf32> to vector<16x64xf32>
    %117 = arith.mulf %105, %116 : vector<16x64xf32>
    %118 = vector.broadcast %107 : vector<1x64xf32> to vector<16x64xf32>
    %119 = arith.mulf %117, %118 : vector<16x64xf32>
    %120 = arith.truncf %119 : vector<16x64xf32> to vector<16x64xbf16>
    %c1_47 = arith.constant 1 : index
    %c0_48 = arith.constant 0 : index
    %c0_49 = arith.constant 0 : index
    %121 = vector.load %arg5[%c1_47, %c0_48, %c0_49] : memref<2x64x320xbf16, #tpu.memory_space<vmem>>, vector<1x64x320xbf16>
    %122 = vector.shape_cast %121 : vector<1x64x320xbf16> to vector<64x320xbf16>
    %cst_50 = arith.constant dense<0.000000e+00> : vector<16x320xf32>
    %123 = tpu.matmul %120, %122, %cst_50 {dimension_numbers = #tpu.dot_dimension_numbers<[1], [0], [0], [1], [0, 0, 1, 1], [], []>} : vector<16x64xbf16>, vector<64x320xbf16>, vector<16x320xf32> -> vector<16x320xf32>
    %124 = vector.extract_strided_slice %123 {offsets = [0, 0], sizes = [16, 128], strides = [1, 1]} : vector<16x320xf32> to vector<16x128xf32>
    %125 = arith.mulf %124, %1 : vector<16x128xf32>
    %126 = vector.extract_strided_slice %123 {offsets = [0, 128], sizes = [16, 128], strides = [1, 1]} : vector<16x320xf32> to vector<16x128xf32>
    %127 = arith.mulf %126, %2 : vector<16x128xf32>
    %128 = arith.addf %125, %127 : vector<16x128xf32>
    %129 = arith.truncf %128 : vector<16x128xf32> to vector<16x128xbf16>
    %130 = vector.extract_strided_slice %123 {offsets = [0, 256], sizes = [16, 64], strides = [1, 1]} : vector<16x320xf32> to vector<16x64xf32>
    %131 = arith.truncf %130 : vector<16x64xf32> to vector<16x64xbf16>
    %132 = vector.extract_strided_slice %129 {offsets = [0, 0], sizes = [16, 64], strides = [1, 1]} : vector<16x128xbf16> to vector<16x64xbf16>
    %133 = vector.extract_strided_slice %132 {offsets = [0, 0], sizes = [16, 16], strides = [1, 1]} : vector<16x64xbf16> to vector<16x16xbf16>
    %134 = vector.extract_strided_slice %132 {offsets = [0, 16], sizes = [16, 16], strides = [1, 1]} : vector<16x64xbf16> to vector<16x16xbf16>
    %135 = vector.extract_strided_slice %132 {offsets = [0, 32], sizes = [16, 16], strides = [1, 1]} : vector<16x64xbf16> to vector<16x16xbf16>
    %136 = vector.extract_strided_slice %132 {offsets = [0, 48], sizes = [16, 16], strides = [1, 1]} : vector<16x64xbf16> to vector<16x16xbf16>
    %137 = tpu.concatenate %133, %134, %135, %136 in 0 : vector<16x16xbf16>, vector<16x16xbf16>, vector<16x16xbf16>, vector<16x16xbf16> -> vector<64x16xbf16>
    %138 = vector.extract_strided_slice %129 {offsets = [0, 64], sizes = [16, 64], strides = [1, 1]} : vector<16x128xbf16> to vector<16x64xbf16>
    %139 = vector.extract_strided_slice %138 {offsets = [0, 0], sizes = [16, 16], strides = [1, 1]} : vector<16x64xbf16> to vector<16x16xbf16>
    %140 = vector.extract_strided_slice %138 {offsets = [0, 16], sizes = [16, 16], strides = [1, 1]} : vector<16x64xbf16> to vector<16x16xbf16>
    %141 = vector.extract_strided_slice %138 {offsets = [0, 32], sizes = [16, 16], strides = [1, 1]} : vector<16x64xbf16> to vector<16x16xbf16>
    %142 = vector.extract_strided_slice %138 {offsets = [0, 48], sizes = [16, 16], strides = [1, 1]} : vector<16x64xbf16> to vector<16x16xbf16>
    %143 = tpu.concatenate %139, %140, %141, %142 in 0 : vector<16x16xbf16>, vector<16x16xbf16>, vector<16x16xbf16>, vector<16x16xbf16> -> vector<64x16xbf16>
    %144 = vector.extract_strided_slice %131 {offsets = [0, 0], sizes = [16, 16], strides = [1, 1]} : vector<16x64xbf16> to vector<16x16xbf16>
    %145 = vector.extract_strided_slice %131 {offsets = [0, 16], sizes = [16, 16], strides = [1, 1]} : vector<16x64xbf16> to vector<16x16xbf16>
    %146 = vector.extract_strided_slice %131 {offsets = [0, 32], sizes = [16, 16], strides = [1, 1]} : vector<16x64xbf16> to vector<16x16xbf16>
    %147 = vector.extract_strided_slice %131 {offsets = [0, 48], sizes = [16, 16], strides = [1, 1]} : vector<16x64xbf16> to vector<16x16xbf16>
    %148 = tpu.concatenate %144, %145, %146, %147 in 0 : vector<16x16xbf16>, vector<16x16xbf16>, vector<16x16xbf16>, vector<16x16xbf16> -> vector<64x16xbf16>
    %cst_51 = arith.constant dense<0.000000e+00> : vector<64x64xf32>
    %149 = tpu.matmul %137, %143, %cst_51 {dimension_numbers = #tpu.dot_dimension_numbers<[1], [1], [0], [0], [0, 0, 1, 0], [], []>} : vector<64x16xbf16>, vector<64x16xbf16>, vector<64x64xf32> -> vector<64x64xf32>
    %cst_52 = arith.constant 2.500000e-01 : f32
    %150 = vector.broadcast %cst_52 : f32 to vector<64x64xf32>
    %151 = arith.mulf %149, %150 : vector<64x64xf32>
    %152 = arith.addf %151, %3 : vector<64x64xf32>
    %cst_53 = arith.constant dense<0xFF800000> : vector<64xf32>
    %153 = vector.multi_reduction <maximumf>, %152, %cst_53 [1] : vector<64x64xf32> to vector<64xf32>
    %154 = vector.shape_cast %153 : vector<64xf32> to vector<64x1xf32>
    %155 = vector.broadcast %154 : vector<64x1xf32> to vector<64x64xf32>
    %156 = arith.subf %152, %155 : vector<64x64xf32>
    %157 = math.exp %156 : vector<64x64xf32>
    %cst_54 = arith.constant dense<0.000000e+00> : vector<64xf32>
    %158 = vector.multi_reduction <add>, %157, %cst_54 [1] : vector<64x64xf32> to vector<64xf32>
    %159 = vector.shape_cast %158 : vector<64xf32> to vector<64x1xf32>
    %160 = vector.broadcast %159 : vector<64x1xf32> to vector<64x64xf32>
    %161 = arith.divf %157, %160 : vector<64x64xf32>
    %162 = arith.truncf %161 : vector<64x64xf32> to vector<64x64xbf16>
    %cst_55 = arith.constant dense<0.000000e+00> : vector<64x16xf32>
    %163 = tpu.matmul %162, %148, %cst_55 {dimension_numbers = #tpu.dot_dimension_numbers<[1], [0], [0], [1], [0, 0, 1, 1], [], []>} : vector<64x64xbf16>, vector<64x16xbf16>, vector<64x16xf32> -> vector<64x16xf32>
    %164 = vector.extract_strided_slice %163 {offsets = [0, 0], sizes = [16, 16], strides = [1, 1]} : vector<64x16xf32> to vector<16x16xf32>
    %165 = vector.extract_strided_slice %163 {offsets = [16, 0], sizes = [16, 16], strides = [1, 1]} : vector<64x16xf32> to vector<16x16xf32>
    %166 = vector.extract_strided_slice %163 {offsets = [32, 0], sizes = [16, 16], strides = [1, 1]} : vector<64x16xf32> to vector<16x16xf32>
    %167 = vector.extract_strided_slice %163 {offsets = [48, 0], sizes = [16, 16], strides = [1, 1]} : vector<64x16xf32> to vector<16x16xf32>
    %168 = tpu.concatenate %164, %165, %166, %167 in 1 : vector<16x16xf32>, vector<16x16xf32>, vector<16x16xf32>, vector<16x16xf32> -> vector<16x64xf32>
    %169 = arith.truncf %168 : vector<16x64xf32> to vector<16x64xbf16>
    %c1_56 = arith.constant 1 : index
    %c0_57 = arith.constant 0 : index
    %c0_58 = arith.constant 0 : index
    %170 = vector.load %arg6[%c1_56, %c0_57, %c0_58] : memref<2x64x64xbf16, #tpu.memory_space<vmem>>, vector<1x64x64xbf16>
    %171 = vector.shape_cast %170 : vector<1x64x64xbf16> to vector<64x64xbf16>
    %cst_59 = arith.constant dense<0.000000e+00> : vector<16x64xf32>
    %172 = tpu.matmul %169, %171, %cst_59 {dimension_numbers = #tpu.dot_dimension_numbers<[1], [0], [0], [1], [0, 0, 1, 1], [], []>} : vector<16x64xbf16>, vector<64x64xbf16>, vector<16x64xf32> -> vector<16x64xf32>
    %173 = arith.addf %105, %172 : vector<16x64xf32>
    %c1_60 = arith.constant 1 : index
    %c0_61 = arith.constant 0 : index
    %c0_62 = arith.constant 0 : index
    %174 = vector.load %arg7[%c1_60, %c0_61, %c0_62] : memref<2x1x64xf32, #tpu.memory_space<vmem>>, vector<1x1x64xf32>
    %175 = vector.shape_cast %174 : vector<1x1x64xf32> to vector<1x64xf32>
    %176 = arith.mulf %173, %173 : vector<16x64xf32>
    %cst_63 = arith.constant dense<0.000000e+00> : vector<16xf32>
    %177 = vector.multi_reduction <add>, %176, %cst_63 [1] : vector<16x64xf32> to vector<16xf32>
    %178 = vector.shape_cast %177 : vector<16xf32> to vector<16x1xf32>
    %cst_64 = arith.constant 6.400000e+01 : f32
    %179 = vector.broadcast %cst_64 : f32 to vector<16x1xf32>
    %180 = arith.divf %178, %179 : vector<16x1xf32>
    %cst_65 = arith.constant 9.99999997E-7 : f32
    %181 = vector.broadcast %cst_65 : f32 to vector<16x1xf32>
    %182 = arith.addf %180, %181 : vector<16x1xf32>
    %183 = math.rsqrt %182 : vector<16x1xf32>
    %184 = vector.broadcast %183 : vector<16x1xf32> to vector<16x64xf32>
    %185 = arith.mulf %173, %184 : vector<16x64xf32>
    %186 = vector.broadcast %175 : vector<1x64xf32> to vector<16x64xf32>
    %187 = arith.mulf %185, %186 : vector<16x64xf32>
    %188 = arith.truncf %187 : vector<16x64xf32> to vector<16x64xbf16>
    %c1_66 = arith.constant 1 : index
    %c0_67 = arith.constant 0 : index
    %c0_68 = arith.constant 0 : index
    %189 = vector.load %arg8[%c1_66, %c0_67, %c0_68] : memref<2x64x256xbf16, #tpu.memory_space<vmem>>, vector<1x64x256xbf16>
    %190 = vector.shape_cast %189 : vector<1x64x256xbf16> to vector<64x256xbf16>
    %cst_69 = arith.constant dense<0.000000e+00> : vector<16x256xf32>
    %191 = tpu.matmul %188, %190, %cst_69 {dimension_numbers = #tpu.dot_dimension_numbers<[1], [0], [0], [1], [0, 0, 1, 1], [], []>} : vector<16x64xbf16>, vector<64x256xbf16>, vector<16x256xf32> -> vector<16x256xf32>
    %192 = vector.extract_strided_slice %191 {offsets = [0, 0], sizes = [16, 128], strides = [1, 1]} : vector<16x256xf32> to vector<16x128xf32>
    %193 = vector.extract_strided_slice %191 {offsets = [0, 128], sizes = [16, 128], strides = [1, 1]} : vector<16x256xf32> to vector<16x128xf32>
    %cst_70 = arith.constant 0.000000e+00 : f32
    %194 = vector.broadcast %cst_70 : f32 to vector<16x128xf32>
    %195 = arith.subf %194, %192 : vector<16x128xf32>
    %196 = math.exp %195 : vector<16x128xf32>
    %cst_71 = arith.constant 1.000000e+00 : f32
    %197 = vector.broadcast %cst_71 : f32 to vector<16x128xf32>
    %198 = arith.addf %197, %196 : vector<16x128xf32>
    %cst_72 = arith.constant 1.000000e+00 : f32
    %199 = vector.broadcast %cst_72 : f32 to vector<16x128xf32>
    %200 = arith.divf %199, %198 : vector<16x128xf32>
    %201 = arith.mulf %192, %200 : vector<16x128xf32>
    %202 = arith.mulf %201, %193 : vector<16x128xf32>
    %203 = arith.truncf %202 : vector<16x128xf32> to vector<16x128xbf16>
    %c1_73 = arith.constant 1 : index
    %c0_74 = arith.constant 0 : index
    %c0_75 = arith.constant 0 : index
    %204 = vector.load %arg9[%c1_73, %c0_74, %c0_75] : memref<2x128x64xbf16, #tpu.memory_space<vmem>>, vector<1x128x64xbf16>
    %205 = vector.shape_cast %204 : vector<1x128x64xbf16> to vector<128x64xbf16>
    %cst_76 = arith.constant dense<0.000000e+00> : vector<16x64xf32>
    %206 = tpu.matmul %203, %205, %cst_76 {dimension_numbers = #tpu.dot_dimension_numbers<[1], [0], [0], [1], [0, 0, 1, 1], [], []>} : vector<16x128xbf16>, vector<128x64xbf16>, vector<16x64xf32> -> vector<16x64xf32>
    %207 = arith.addf %173, %206 : vector<16x64xf32>
    %c0_77 = arith.constant 0 : index
    %c0_78 = arith.constant 0 : index
    %208 = vector.load %arg10[%c0_77, %c0_78] : memref<1x64xf32, #tpu.memory_space<vmem>>, vector<1x64xf32>
    %209 = arith.mulf %207, %207 : vector<16x64xf32>
    %cst_79 = arith.constant dense<0.000000e+00> : vector<16xf32>
    %210 = vector.multi_reduction <add>, %209, %cst_79 [1] : vector<16x64xf32> to vector<16xf32>
    %211 = vector.shape_cast %210 : vector<16xf32> to vector<16x1xf32>
    %cst_80 = arith.constant 6.400000e+01 : f32
    %212 = vector.broadcast %cst_80 : f32 to vector<16x1xf32>
    %213 = arith.divf %211, %212 : vector<16x1xf32>
    %cst_81 = arith.constant 9.99999997E-7 : f32
    %214 = vector.broadcast %cst_81 : f32 to vector<16x1xf32>
    %215 = arith.addf %213, %214 : vector<16x1xf32>
    %216 = math.rsqrt %215 : vector<16x1xf32>
    %217 = vector.broadcast %216 : vector<16x1xf32> to vector<16x64xf32>
    %218 = arith.mulf %207, %217 : vector<16x64xf32>
    %219 = vector.broadcast %208 : vector<1x64xf32> to vector<16x64xf32>
    %220 = arith.mulf %218, %219 : vector<16x64xf32>
    %221 = arith.truncf %220 : vector<16x64xf32> to vector<16x64xbf16>
    %c0_82 = arith.constant 0 : index
    %c0_83 = arith.constant 0 : index
    %222 = vector.load %arg11[%c0_82, %c0_83] : memref<64x256xbf16, #tpu.memory_space<vmem>>, vector<64x256xbf16>
    %cst_84 = arith.constant dense<0.000000e+00> : vector<16x256xf32>
    %223 = tpu.matmul %221, %222, %cst_84 {dimension_numbers = #tpu.dot_dimension_numbers<[1], [0], [0], [1], [0, 0, 1, 1], [], []>} : vector<16x64xbf16>, vector<64x256xbf16>, vector<16x256xf32> -> vector<16x256xf32>
    %c0_85 = arith.constant 0 : index
    %c0_86 = arith.constant 0 : index
    %224 = vector.load %arg12[%c0_85, %c0_86] : memref<16x256xf32, #tpu.memory_space<vmem>>, vector<16x256xf32>
    tpu.vector_store %arg12[%c0_85, %c0_86], %223 {strides = array<i32>} : memref<16x256xf32, #tpu.memory_space<vmem>>, vector<16x256xf32>,
    return
  }
}

</mosaic_0001>

<llo_original>
// kernel: llama_forward_pallas.1
$region0: #{llama_forward_pallas.1}
  #allocation0 [shape = 'u32[]', space=smem, size = 0x4, offset = 0x4, fixed_abs, tag = 'smem constant byte address 0x4 - core index']
  #allocation1 [shape = 'u32[144,128]{1,0:T(1,128)}', space=vmem, size = 0x12000, scoped, tag = 'internal scratch']
  %s0 = inlined_call_operand.vmem [shape: f32[16,64], index: 0, kind: input, shape index: {}]
  %s1 = inlined_call_operand.vmem [shape: f32[16,128], index: 1, kind: input, shape index: {}]
  %s2 = inlined_call_operand.vmem [shape: f32[16,128], index: 2, kind: input, shape index: {}]
  %s3 = inlined_call_operand.vmem [shape: f32[64,64], index: 3, kind: input, shape index: {}]
  %s4 = inlined_call_operand.vmem [shape: f32[2,1,64], index: 4, kind: input, shape index: {}]
  %s5 = inlined_call_operand.vmem [shape: bf16[2,64,320], index: 5, kind: input, shape index: {}]
  %s6 = inlined_call_operand.vmem [shape: bf16[2,64,64], index: 6, kind: input, shape index: {}]
  %s7 = inlined_call_operand.vmem [shape: f32[2,1,64], index: 7, kind: input, shape index: {}]
  %s8 = inlined_call_operand.vmem [shape: bf16[2,64,256], index: 8, kind: input, shape index: {}]
  %s9 = inlined_call_operand.vmem [shape: bf16[2,128,64], index: 9, kind: input, shape index: {}]
  %s10 = inlined_call_operand.vmem [shape: f32[1,64], index: 10, kind: input, shape index: {}]
  %s11 = inlined_call_operand.vmem [shape: bf16[64,256], index: 11, kind: input, shape index: {}]
  %s12 = inlined_call_operand.hbm [shape: f32[16,256], index: 12, kind: output, shape index: {}]
  %s13 = sld [smem:[#allocation0]]
  $region58: #{llama_forward_pallas.1} parent=0
    _
  %s15 = ssub.s32 1, %s13
  %s16 = scalar_select 0, %s15, %s13
  $region1: #{llama_forward_pallas.1} parent=0
    #allocation2 [shape = 'u8[16384]{0}', space=vmem, size = 0x4000, scoped, tag = 'output window, operand 0, single buffered']
    #allocation3 [shape = 's32[1]{0}', space=sflag, size = 0x4, scoped, tag = 'scoped memory for llama_forward_pallas.1']
    %17 = vsyncpa [#allocation3], 0
    // Predicated region
    $region2: #{llama_forward_pallas.1} parent=1 // pred_check
      _
    $region3: #{llama_forward_pallas.1} parent=1 // pred_check_branch
      %19 = sbr.rel (0) target = $region5
    $region4: #{llama_forward_pallas.1} parent=1 // pred_region
      _
    $region5: #{llama_forward_pallas.1} parent=1 // pred_fallthru
      _
    // Predicated region
    $region6: #{llama_forward_pallas.1} parent=1 // pred_check
      _
    $region7: #{llama_forward_pallas.1} parent=1 // pred_check_branch
      %21 = sbr.rel (0) target = $region9
    $region8: #{llama_forward_pallas.1} parent=1 // pred_region
      _
    $region9: #{llama_forward_pallas.1} parent=1 // pred_fallthru
      _
    // Predicated region
    $region10: #{llama_forward_pallas.1} parent=1 // pred_check
      _
    $region11: #{llama_forward_pallas.1} parent=1 // pred_check_branch
      %23 = sbr.rel (0) target = $region13
    $region12: #{llama_forward_pallas.1} parent=1 // pred_region
      _
    $region13: #{llama_forward_pallas.1} parent=1 // pred_fallthru
      _
    // Predicated region
    $region14: #{llama_forward_pallas.1} parent=1 // pred_check
      _
    $region15: #{llama_forward_pallas.1} parent=1 // pred_check_branch
      %25 = sbr.rel (0) target = $region17
    $region16: #{llama_forward_pallas.1} parent=1 // pred_region
      _
    $region17: #{llama_forward_pallas.1} parent=1 // pred_fallthru
      _
    // Predicated region
    $region18: #{llama_forward_pallas.1} parent=1 // pred_check
      _
    $region19: #{llama_forward_pallas.1} parent=1 // pred_check_branch
      %27 = sbr.rel (0) target = $region21
    $region20: #{llama_forward_pallas.1} parent=1 // pred_region
      _
    $region21: #{llama_forward_pallas.1} parent=1 // pred_fallthru
      _
    // Predicated region
    $region22: #{llama_forward_pallas.1} parent=1 // pred_check
      _
    $region23: #{llama_forward_pallas.1} parent=1 // pred_check_branch
      %29 = sbr.rel (0) target = $region25
    $region24: #{llama_forward_pallas.1} parent=1 // pred_region
      _
    $region25: #{llama_forward_pallas.1} parent=1 // pred_fallthru
      _
    // Predicated region
    $region26: #{llama_forward_pallas.1} parent=1 // pred_check
      _
    $region27: #{llama_forward_pallas.1} parent=1 // pred_check_branch
      %31 = sbr.rel (0) target = $region29
    $region28: #{llama_forward_pallas.1} parent=1 // pred_region
      _
    $region29: #{llama_forward_pallas.1} parent=1 // pred_fallthru
      _
    // Predicated region
    $region30: #{llama_forward_pallas.1} parent=1 // pred_check
      _
    $region31: #{llama_forward_pallas.1} parent=1 // pred_check_branch
      %33 = sbr.rel (0) target = $region33
    $region32: #{llama_forward_pallas.1} parent=1 // pred_region
      _
    $region33: #{llama_forward_pallas.1} parent=1 // pred_fallthru
      _
    // Predicated region
    $region34: #{llama_forward_pallas.1} parent=1 // pred_check
      _
    $region35: #{llama_forward_pallas.1} parent=1 // pred_check_branch
      %35 = sbr.rel (0) target = $region37
    $region36: #{llama_forward_pallas.1} parent=1 // pred_region
      _
    $region37: #{llama_forward_pallas.1} parent=1 // pred_fallthru
      _
    // Predicated region
    $region38: #{llama_forward_pallas.1} parent=1 // pred_check
      _
    $region39: #{llama_forward_pallas.1} parent=1 // pred_check_branch
      %37 = sbr.rel (0) target = $region41
    $region40: #{llama_forward_pallas.1} parent=1 // pred_region
      _
    $region41: #{llama_forward_pallas.1} parent=1 // pred_fallthru
      _
    // Predicated region
    $region42: #{llama_forward_pallas.1} parent=1 // pred_check
      _
    $region43: #{llama_forward_pallas.1} parent=1 // pred_check_branch
      %39 = sbr.rel (0) target = $region45
    $region44: #{llama_forward_pallas.1} parent=1 // pred_region
      _
    $region45: #{llama_forward_pallas.1} parent=1 // pred_fallthru
      _
    // Predicated region
    $region46: #{llama_forward_pallas.1} parent=1 // pred_check
      _
    $region47: #{llama_forward_pallas.1} parent=1 // pred_check_branch
      %41 = sbr.rel (0) target = $region49
    $region48: #{llama_forward_pallas.1} parent=1 // pred_region
      _
    $region49: #{llama_forward_pallas.1} parent=1 // pred_fallthru
      _
    %v43 = vld [vmem:[%s0] sm:$0xff]
    %v44 = vld [vmem:[%s0 + $0x8] sm:$0xff]
    %v45 = vld [vmem:[%s1] sm:$0xff]
    %v46 = vld [vmem:[%s1 + $0x8] sm:$0xff]
    %v47 = vld [vmem:[%s2] sm:$0xff]
    %v48 = vld [vmem:[%s2 + $0x8] sm:$0xff]
    %v49 = vld [vmem:[%s3] sm:$0xff]
    %v50 = vld [vmem:[%s3 + $0x8] sm:$0xff]
    %v51 = vld [vmem:[%s3 + $0x10] sm:$0xff]
    %v52 = vld [vmem:[%s3 + $0x18] sm:$0xff]
    %v53 = vld [vmem:[%s3 + $0x20] sm:$0xff]
    %v54 = vld [vmem:[%s3 + $0x28] sm:$0xff]
    %v55 = vld [vmem:[%s3 + $0x30] sm:$0xff]
    %v56 = vld [vmem:[%s3 + $0x38] sm:$0xff]
    %v57 = vld [vmem:[%s4] sm:$0x1]
    %v58 = vmul.f32 %v43, %v43
    %v59 = vmul.f32 %v44, %v44
    %vm60 = vcmask 523264
    %v61 = vsel %vm60, %v58, 0.0
    %62 = vadd.xlane.f32.xlu0 %v61
    %v63 = vpop.xlane.xlu0 %62
    %v64 = vsel %vm60, %v59, 0.0
    %65 = vadd.xlane.f32.xlu0 %v64
    %v66 = vpop.xlane.xlu0 %65
    %v67 = vrcp.pop 64.0
    %v68 = vmul.f32 %v63, %v67
    %v69 = vmul.f32 %v66, %v67
    %v70 = vadd.f32 %v68, 1e-06
    %v71 = vadd.f32 %v69, 1e-06
    %v72 = vrsqrt.pop %v70
    %v73 = vrsqrt.pop %v71
    %v74 = vmul.f32 %v43, %v72
    %v75 = vmul.f32 %v44, %v73
    %v77 = vlaneseq
    %v78 = vshrl.u32 %v77, 7
    %v79 = vsub.s32 0, %v78
    %v80 = vrot.slane %v57, %v79
    %v82 = vmul.f32 %v74, %v80
    %v83 = vmul.f32 %v75, %v80
    %v84 = vpack.c.bf16 %v83, %v82
    %v85 = vld [vmem:[%s5] sm:$0xff]
    %v86 = vld [vmem:[%s5 + $0x8] sm:$0xf]
    %v87 = vld [vmem:[%s5 + $0xc] sm:$0xff]
    %v88 = vld [vmem:[%s5 + $0x14] sm:$0xf]
    %v89 = vld [vmem:[%s5 + $0x18] sm:$0xff]
    %v90 = vld [vmem:[%s5 + $0x20] sm:$0xf]
    %v91 = vld [vmem:[%s5 + $0x24] sm:$0xff]
    %v92 = vld [vmem:[%s5 + $0x2c] sm:$0xf]
    %v93 = vld [vmem:[%s5 + $0x30] sm:$0xff]
    %v94 = vld [vmem:[%s5 + $0x38] sm:$0xf]
    %v95 = vld [vmem:[%s5 + $0x3c] sm:$0xff]
    %v96 = vld [vmem:[%s5 + $0x44] sm:$0xf]
    %v97 = vld [vmem:[%s5 + $0x48] sm:$0xff]
    %v98 = vld [vmem:[%s5 + $0x50] sm:$0xf]
    %v99 = vld [vmem:[%s5 + $0x54] sm:$0xff]
    %v100 = vld [vmem:[%s5 + $0x5c] sm:$0xf]
    %v117 = vunpack.c.l.b16 %v85
    %v118 = vunpack.c.h.b16 %v85
    %v119 = vunpack.c.l.b16 %v86
    %v120 = vunpack.c.l.b16 %v87
    %v121 = vunpack.c.h.b16 %v87
    %v122 = vunpack.c.l.b16 %v88
    %v123 = vunpack.c.l.b16 %v89
    %v124 = vunpack.c.h.b16 %v89
    %v125 = vunpack.c.l.b16 %v90
    %v126 = vunpack.c.l.b16 %v91
    %v127 = vunpack.c.h.b16 %v91
    %v128 = vunpack.c.l.b16 %v92
    %v129 = vunpack.c.l.b16 %v93
    %v130 = vunpack.c.h.b16 %v93
    %v131 = vunpack.c.l.b16 %v94
    %v132 = vunpack.c.l.b16 %v95
    %v133 = vunpack.c.h.b16 %v95
    %v134 = vunpack.c.l.b16 %v96
    %v135 = vunpack.c.l.b16 %v97
    %v136 = vunpack.c.h.b16 %v97
    %v137 = vunpack.c.l.b16 %v98
    %v138 = vunpack.c.l.b16 %v99
    %v139 = vunpack.c.h.b16 %v99
    %v140 = vunpack.c.l.b16 %v100
    %v141 = vpack.c.b16 %v120, %v117
    %v142 = vpack.c.b16 %v121, %v118
    %v143 = vpack.c.b16 %v122, %v119
    %v144 = vpack.c.b16 %v126, %v123
    %v145 = vpack.c.b16 %v127, %v124
    %v146 = vpack.c.b16 %v128, %v125
    %v147 = vpack.c.b16 %v132, %v129
    %v148 = vpack.c.b16 %v133, %v130
    %v149 = vpack.c.b16 %v134, %v131
    %v150 = vpack.c.b16 %v138, %v135
    %v151 = vpack.c.b16 %v139, %v136
    %v152 = vpack.c.b16 %v140, %v137
    %v166 = vsel %vm60, %v84, 0
    %168 = vmatprep.subr.bf16.mxu0 %v142
    %169 = vmatpush1.bf16.msra.mxu0 %v141
    %170 = vmatprep.subr.bf16.mxu0 %v145
    %171 = vmatpush1.bf16.msra.mxu0 %v144
    %172 = vmatprep.subr.bf16.mxu0 %v148
    %173 = vmatpush1.bf16.msra.mxu0 %v147
    %174 = vmatprep.subr.bf16.mxu0 %v151
    %175 = vmatpush1.bf16.msra.mxu0 %v150
    %176 = vmatprep.subr.bf16.mxu0 0
    %177 = vmatpush1.bf16.msra.mxu0 0
    %178 = vmatprep.subr.bf16.mxu0 0
    %179 = vmatpush1.bf16.msra.mxu0 0
    %180 = vmatprep.subr.bf16.mxu0 0
    %181 = vmatpush1.bf16.msra.mxu0 0
    %182 = vmatprep.subr.bf16.mxu0 0
    %183 = vmatpush1.bf16.msra.mxu0 0
    %184 = vmatprep.subr.bf16.mxu0 0
    %185 = vmatpush1.bf16.msra.mxu0 0
    %186 = vmatprep.subr.bf16.mxu0 0
    %187 = vmatpush1.bf16.msra.mxu0 0
    %188 = vmatprep.subr.bf16.mxu0 0
    %189 = vmatpush1.bf16.msra.mxu0 0
    %190 = vmatprep.subr.bf16.mxu0 0
    %191 = vmatpush1.bf16.msra.mxu0 0
    %192 = vmatprep.subr.bf16.mxu0 0
    %193 = vmatpush1.bf16.msra.mxu0 0
    %194 = vmatprep.subr.bf16.mxu0 0
    %195 = vmatpush1.bf16.msra.mxu0 0
    %196 = vmatprep.subr.bf16.mxu0 0
    %197 = vmatpush1.bf16.msra.mxu0 0
    %198 = vmatprep.subr.bf16.mxu0 0
    %199 = vmatpush1.bf16.msra.mxu0 0
    %200 = vmatprep.mubr.bf16.mxu0 0
    %201 = vmatmul.mubr.bf16.gmra.mrb[0].mxu0 %v166
    %v202 = vpop.f32.mrb[0].mxu0
    %v203 = vadd.f32 0.0, %v202
    %v204 = vpop.f32.mrb[0].mxu0
    %v205 = vadd.f32 0.0, %v204
    %v206 = vpop.f32.mrb[0].mxu0
    %v207 = vadd.f32 0.0, %v206
    %v208 = vpop.f32.mrb[0].mxu0
    %v209 = vadd.f32 0.0, %v208
    %210 = vdwg.mxu0
    %211 = vmatprep.subr.bf16.mxu0 0
    %212 = vmatpush1.bf16.msra.mxu0 %v143
    %213 = vmatprep.subr.bf16.mxu0 0
    %214 = vmatpush1.bf16.msra.mxu0 %v146
    %215 = vmatprep.subr.bf16.mxu0 0
    %216 = vmatpush1.bf16.msra.mxu0 %v149
    %217 = vmatprep.subr.bf16.mxu0 0
    %218 = vmatpush1.bf16.msra.mxu0 %v152
    %219 = vmatprep.subr.bf16.mxu0 0
    %220 = vmatpush1.bf16.msra.mxu0 0
    %221 = vmatprep.subr.bf16.mxu0 0
    %222 = vmatpush1.bf16.msra.mxu0 0
    %223 = vmatprep.subr.bf16.mxu0 0
    %224 = vmatpush1.bf16.msra.mxu0 0
    %225 = vmatprep.subr.bf16.mxu0 0
    %226 = vmatpush1.bf16.msra.mxu0 0
    %227 = vmatprep.subr.bf16.mxu0 0
    %228 = vmatpush1.bf16.msra.mxu0 0
    %229 = vmatprep.subr.bf16.mxu0 0
    %230 = vmatpush1.bf16.msra.mxu0 0
    %231 = vmatprep.subr.bf16.mxu0 0
    %232 = vmatpush1.bf16.msra.mxu0 0
    %233 = vmatprep.subr.bf16.mxu0 0
    %234 = vmatpush1.bf16.msra.mxu0 0
    %235 = vmatprep.subr.bf16.mxu0 0
    %236 = vmatpush1.bf16.msra.mxu0 0
    %237 = vmatprep.subr.bf16.mxu0 0
    %238 = vmatpush1.bf16.msra.mxu0 0
    %239 = vmatprep.subr.bf16.mxu0 0
    %240 = vmatpush1.bf16.msra.mxu0 0
    %241 = vmatprep.subr.bf16.mxu0 0
    %242 = vmatpush1.bf16.msra.mxu0 0
    %243 = vmatprep.mubr.bf16.mxu0 0
    %244 = vmatmul.mubr.bf16.gmra.mrb[0].mxu0 %v166
    %v245 = vpop.f32.mrb[0].mxu0
    %v246 = vadd.f32 0.0, %v245
    %v247 = vpop.f32.mrb[0].mxu0
    %v248 = vpop.f32.mrb[0].mxu0
    %v249 = vadd.f32 0.0, %v248
    %v250 = vpop.f32.mrb[0].mxu0
    %251 = vdwg.mxu0
    %v252 = vmul.f32 %v203, %v45
    %v253 = vmul.f32 %v207, %v46
    %v254 = vmul.f32 %v205, %v47
    %v255 = vmul.f32 %v209, %v48
    %v256 = vadd.f32 %v252, %v254
    %v257 = vadd.f32 %v253, %v255
    %v258 = vpack.c.bf16 %v257, %v256
    %v259 = vpack.c.bf16 %v249, %v246
    %261 = vrot.lane.b32.xlu0 %v258, 112
    %v262 = vpop.permute.xlu0 %261
    %263 = vrot.lane.b32.xlu0 %v258, 96
    %v264 = vpop.permute.xlu0 %263
    %265 = vrot.lane.b32.xlu0 %v258, 80
    %v266 = vpop.permute.xlu0 %265
    %268 = vrot.lane.b32.xlu0 %v259, 112
    %v269 = vpop.permute.xlu0 %268
    %271 = vrot.lane.b32.xlu0 %v259, 96
    %v272 = vpop.permute.xlu0 %271
    %274 = vrot.lane.b32.xlu0 %v259, 80
    %v275 = vpop.permute.xlu0 %274
    %277 = vrot.lane.b32.xlu0 %v258, 64
    %v278 = vpop.permute.xlu0 %277
    %279 = vrot.lane.b32.xlu0 %v262, 64
    %v280 = vpop.permute.xlu0 %279
    %281 = vrot.lane.b32.xlu0 %v264, 64
    %v282 = vpop.permute.xlu0 %281
    %283 = vrot.lane.b32.xlu0 %v266, 64
    %v284 = vpop.permute.xlu0 %283
    %vm285 = vcmask 130048
    %v287 = vsel %vm285, %v258, 0
    %v290 = vsel %vm285, %v262, 0
    %v293 = vsel %vm285, %v264, 0
    %v296 = vsel %vm285, %v266, 0
    %v299 = vsel %vm285, %v278, 0
    %v302 = vsel %vm285, %v280, 0
    %v305 = vsel %vm285, %v282, 0
    %v308 = vsel %vm285, %v284, 0
    %310 = vmatprep.subr.bf16.mxu0 0
    %311 = vmatpush1.bf16.xpose.msra.mxu0 %v299
    %312 = vmatprep.subr.bf16.mxu0 0
    %313 = vmatpush1.bf16.xpose.msra.mxu0 %v302
    %314 = vmatprep.subr.bf16.mxu0 0
    %315 = vmatpush1.bf16.xpose.msra.mxu0 %v305
    %316 = vmatprep.subr.bf16.mxu0 0
    %317 = vmatpush1.bf16.xpose.msra.mxu0 %v308
    %318 = vmatprep.subr.bf16.mxu0 0
    %319 = vmatpush1.bf16.xpose.msra.mxu0 0
    %320 = vmatprep.subr.bf16.mxu0 0
    %321 = vmatpush1.bf16.xpose.msra.mxu0 0
    %322 = vmatprep.subr.bf16.mxu0 0
    %323 = vmatpush1.bf16.xpose.msra.mxu0 0
    %324 = vmatprep.subr.bf16.mxu0 0
    %325 = vmatpush1.bf16.xpose.msra.mxu0 0
    %326 = vmatprep.subr.bf16.mxu0 0
    %327 = vmatpush1.bf16.xpose.msra.mxu0 0
    %328 = vmatprep.subr.bf16.mxu0 0
    %329 = vmatpush1.bf16.xpose.msra.mxu0 0
    %330 = vmatprep.subr.bf16.mxu0 0
    %331 = vmatpush1.bf16.xpose.msra.mxu0 0
    %332 = vmatprep.subr.bf16.mxu0 0
    %333 = vmatpush1.bf16.xpose.msra.mxu0 0
    %334 = vmatprep.subr.bf16.mxu0 0
    %335 = vmatpush1.bf16.xpose.msra.mxu0 0
    %336 = vmatprep.subr.bf16.mxu0 0
    %337 = vmatpush1.bf16.xpose.msra.mxu0 0
    %338 = vmatprep.subr.bf16.mxu0 0
    %339 = vmatpush1.bf16.xpose.msra.mxu0 0
    %340 = vmatprep.subr.bf16.mxu0 0
    %341 = vmatpush1.bf16.xpose.msra.mxu0 0
    %342 = vmatprep.mubr.bf16.mxu0 0
    %343 = vmatmul.mubr.bf16.gmra.mrb[0].mxu0 %v287
    %v344 = vpop.f32.mrb[0].mxu0
    %v345 = vadd.f32 0.0, %v344
    %v346 = vpop.f32.mrb[0].mxu0
    %v347 = vpop.f32.mrb[0].mxu0
    %v348 = vadd.f32 0.0, %v347
    %v349 = vpop.f32.mrb[0].mxu0
    %350 = vmatprep.mubr.bf16.mxu0 0
    %351 = vmatmul.mubr.bf16.gmra.mrb[0].mxu0 %v290
    %v352 = vpop.f32.mrb[0].mxu0
    %v353 = vadd.f32 0.0, %v352
    %v354 = vpop.f32.mrb[0].mxu0
    %v355 = vpop.f32.mrb[0].mxu0
    %v356 = vadd.f32 0.0, %v355
    %v357 = vpop.f32.mrb[0].mxu0
    %358 = vmatprep.mubr.bf16.mxu0 0
    %359 = vmatmul.mubr.bf16.gmra.mrb[0].mxu0 %v293
    %v360 = vpop.f32.mrb[0].mxu0
    %v361 = vadd.f32 0.0, %v360
    %v362 = vpop.f32.mrb[0].mxu0
    %v363 = vpop.f32.mrb[0].mxu0
    %v364 = vadd.f32 0.0, %v363
    %v365 = vpop.f32.mrb[0].mxu0
    %366 = vmatprep.mubr.bf16.mxu0 0
    %367 = vmatmul.mubr.bf16.gmra.mrb[0].mxu0 %v296
    %v368 = vpop.f32.mrb[0].mxu0
    %v369 = vadd.f32 0.0, %v368
    %v370 = vpop.f32.mrb[0].mxu0
    %v371 = vpop.f32.mrb[0].mxu0
    %v372 = vadd.f32 0.0, %v371
    %v373 = vpop.f32.mrb[0].mxu0
    %374 = vdwg.mxu0
    %v375 = vmul.f32 %v345, 0.25
    %v376 = vmul.f32 %v348, 0.25
    %v377 = vmul.f32 %v353, 0.25
    %v378 = vmul.f32 %v356, 0.25
    %v379 = vmul.f32 %v361, 0.25
    %v380 = vmul.f32 %v364, 0.25
    %v381 = vmul.f32 %v369, 0.25
    %v382 = vmul.f32 %v372, 0.25
    %v383 = vadd.f32 %v375, %v49
    %v384 = vadd.f32 %v376, %v50
    %v385 = vadd.f32 %v377, %v51
    %v386 = vadd.f32 %v378, %v52
    %v387 = vadd.f32 %v379, %v53
    %v388 = vadd.f32 %v380, %v54
    %v389 = vadd.f32 %v381, %v55
    %v390 = vadd.f32 %v382, %v56
    %v391 = vsel %vm60, %v383, -inf
    %392 = vmax.xlane.f32.xlu0 %v391
    %v393 = vpop.xlane.xlu0 %392
    %v394 = vsel %vm60, %v384, -inf
    %395 = vmax.xlane.f32.xlu0 %v394
    %v396 = vpop.xlane.xlu0 %395
    %v397 = vsel %vm60, %v385, -inf
    %398 = vmax.xlane.f32.xlu0 %v397
    %v399 = vpop.xlane.xlu0 %398
    %v400 = vsel %vm60, %v386, -inf
    %401 = vmax.xlane.f32.xlu0 %v400
    %v402 = vpop.xlane.xlu0 %401
    %v403 = vsel %vm60, %v387, -inf
    %404 = vmax.xlane.f32.xlu0 %v403
    %v405 = vpop.xlane.xlu0 %404
    %v406 = vsel %vm60, %v388, -inf
    %407 = vmax.xlane.f32.xlu0 %v406
    %v408 = vpop.xlane.xlu0 %407
    %v409 = vsel %vm60, %v389, -inf
    %410 = vmax.xlane.f32.xlu0 %v409
    %v411 = vpop.xlane.xlu0 %410
    %v412 = vsel %vm60, %v390, -inf
    %413 = vmax.xlane.f32.xlu0 %v412
    %v414 = vpop.xlane.xlu0 %413
    %v415 = vsub.f32 %v383, %v393
    %v416 = vsub.f32 %v384, %v396
    %v417 = vsub.f32 %v385, %v399
    %v418 = vsub.f32 %v386, %v402
    %v419 = vsub.f32 %v387, %v405
    %v420 = vsub.f32 %v388, %v408
    %v421 = vsub.f32 %v389, %v411
    %v422 = vsub.f32 %v390, %v414
    %v423 = vmul.f32 %v415, 1.442695
    %v424 = vpow.pop %v423
    %v425 = vmul.f32 %v416, 1.442695
    %v426 = vpow.pop %v425
    %v427 = vmul.f32 %v417, 1.442695
    %v428 = vpow.pop %v427
    %v429 = vmul.f32 %v418, 1.442695
    %v430 = vpow.pop %v429
    %v431 = vmul.f32 %v419, 1.442695
    %v432 = vpow.pop %v431
    %v433 = vmul.f32 %v420, 1.442695
    %v434 = vpow.pop %v433
    %v435 = vmul.f32 %v421, 1.442695
    %v436 = vpow.pop %v435
    %v437 = vmul.f32 %v422, 1.442695
    %v438 = vpow.pop %v437
    %v439 = vsel %vm60, %v424, 0.0
    %440 = vadd.xlane.f32.xlu0 %v439
    %v441 = vpop.xlane.xlu0 %440
    %v442 = vsel %vm60, %v426, 0.0
    %443 = vadd.xlane.f32.xlu0 %v442
    %v444 = vpop.xlane.xlu0 %443
    %v445 = vsel %vm60, %v428, 0.0
    %446 = vadd.xlane.f32.xlu0 %v445
    %v447 = vpop.xlane.xlu0 %446
    %v448 = vsel %vm60, %v430, 0.0
    %449 = vadd.xlane.f32.xlu0 %v448
    %v450 = vpop.xlane.xlu0 %449
    %v451 = vsel %vm60, %v432, 0.0
    %452 = vadd.xlane.f32.xlu0 %v451
    %v453 = vpop.xlane.xlu0 %452
    %v454 = vsel %vm60, %v434, 0.0
    %455 = vadd.xlane.f32.xlu0 %v454
    %v456 = vpop.xlane.xlu0 %455
    %v457 = vsel %vm60, %v436, 0.0
    %458 = vadd.xlane.f32.xlu0 %v457
    %v459 = vpop.xlane.xlu0 %458
    %v460 = vsel %vm60, %v438, 0.0
    %461 = vadd.xlane.f32.xlu0 %v460
    %v462 = vpop.xlane.xlu0 %461
    %v463 = vrcp.pop %v441
    %v464 = vmul.f32 %v424, %v463
    %v465 = vrcp.pop %v444
    %v466 = vmul.f32 %v426, %v465
    %v467 = vrcp.pop %v447
    %v468 = vmul.f32 %v428, %v467
    %v469 = vrcp.pop %v450
    %v470 = vmul.f32 %v430, %v469
    %v471 = vrcp.pop %v453
    %v472 = vmul.f32 %v432, %v471
    %v473 = vrcp.pop %v456
    %v474 = vmul.f32 %v434, %v473
    %v475 = vrcp.pop %v459
    %v476 = vmul.f32 %v436, %v475
    %v477 = vrcp.pop %v462
    %v478 = vmul.f32 %v438, %v477
    %v479 = vpack.c.bf16 %v466, %v464
    %v480 = vpack.c.bf16 %v470, %v468
    %v481 = vpack.c.bf16 %v474, %v472
    %v482 = vpack.c.bf16 %v478, %v476
    %v484 = vsel %vm60, %v479, 0
    %v487 = vsel %vm60, %v480, 0
    %v490 = vsel %vm60, %v481, 0
    %v493 = vsel %vm60, %v482, 0
    %495 = vmatprep.subr.bf16.mxu0 0
    %496 = vmatpush1.bf16.msra.mxu0 %v259
    %497 = vmatprep.subr.bf16.mxu0 0
    %498 = vmatpush1.bf16.msra.mxu0 %v269
    %499 = vmatprep.subr.bf16.mxu0 0
    %500 = vmatpush1.bf16.msra.mxu0 %v272
    %501 = vmatprep.subr.bf16.mxu0 0
    %502 = vmatpush1.bf16.msra.mxu0 %v275
    %503 = vmatprep.subr.bf16.mxu0 0
    %504 = vmatpush1.bf16.msra.mxu0 0
    %505 = vmatprep.subr.bf16.mxu0 0
    %506 = vmatpush1.bf16.msra.mxu0 0
    %507 = vmatprep.subr.bf16.mxu0 0
    %508 = vmatpush1.bf16.msra.mxu0 0
    %509 = vmatprep.subr.bf16.mxu0 0
    %510 = vmatpush1.bf16.msra.mxu0 0
    %511 = vmatprep.subr.bf16.mxu0 0
    %512 = vmatpush1.bf16.msra.mxu0 0
    %513 = vmatprep.subr.bf16.mxu0 0
    %514 = vmatpush1.bf16.msra.mxu0 0
    %515 = vmatprep.subr.bf16.mxu0 0
    %516 = vmatpush1.bf16.msra.mxu0 0
    %517 = vmatprep.subr.bf16.mxu0 0
    %518 = vmatpush1.bf16.msra.mxu0 0
    %519 = vmatprep.subr.bf16.mxu0 0
    %520 = vmatpush1.bf16.msra.mxu0 0
    %521 = vmatprep.subr.bf16.mxu0 0
    %522 = vmatpush1.bf16.msra.mxu0 0
    %523 = vmatprep.subr.bf16.mxu0 0
    %524 = vmatpush1.bf16.msra.mxu0 0
    %525 = vmatprep.subr.bf16.mxu0 0
    %526 = vmatpush1.bf16.msra.mxu0 0
    %527 = vmatprep.mubr.bf16.mxu0 0
    %528 = vmatmul.mubr.bf16.gmra.mrb[0].mxu0 %v484
    %v529 = vpop.f32.mrb[0].mxu0
    %v530 = vadd.f32 0.0, %v529
    %v531 = vpop.f32.mrb[0].mxu0
    %v532 = vpop.f32.mrb[0].mxu0
    %v533 = vadd.f32 0.0, %v532
    %v534 = vpop.f32.mrb[0].mxu0
    %535 = vmatprep.mubr.bf16.mxu0 0
    %536 = vmatmul.mubr.bf16.gmra.mrb[0].mxu0 %v487
    %v537 = vpop.f32.mrb[0].mxu0
    %v538 = vadd.f32 0.0, %v537
    %v539 = vpop.f32.mrb[0].mxu0
    %v540 = vpop.f32.mrb[0].mxu0
    %v541 = vadd.f32 0.0, %v540
    %v542 = vpop.f32.mrb[0].mxu0
    %543 = vmatprep.mubr.bf16.mxu0 0
    %544 = vmatmul.mubr.bf16.gmra.mrb[0].mxu0 %v490
    %v545 = vpop.f32.mrb[0].mxu0
    %v546 = vadd.f32 0.0, %v545
    %v547 = vpop.f32.mrb[0].mxu0
    %v548 = vpop.f32.mrb[0].mxu0
    %v549 = vadd.f32 0.0, %v548
    %v550 = vpop.f32.mrb[0].mxu0
    %551 = vmatprep.mubr.bf16.mxu0 0
    %552 = vmatmul.mubr.bf16.gmra.mrb[0].mxu0 %v493
    %v553 = vpop.f32.mrb[0].mxu0
    %v554 = vadd.f32 0.0, %v553
    %v555 = vpop.f32.mrb[0].mxu0
    %v556 = vpop.f32.mrb[0].mxu0
    %v557 = vadd.f32 0.0, %v556
    %v558 = vpop.f32.mrb[0].mxu0
    %559 = vdwg.mxu0
    %562 = vrot.lane.b32.xlu0 %v538, 16
    %v563 = vpop.permute.xlu0 %562
    %564 = vrot.lane.b32.xlu0 %v541, 16
    %v565 = vpop.permute.xlu0 %564
    %570 = vrot.lane.b32.xlu0 %v546, 32
    %v571 = vpop.permute.xlu0 %570
    %572 = vrot.lane.b32.xlu0 %v549, 32
    %v573 = vpop.permute.xlu0 %572
    %578 = vrot.lane.b32.xlu0 %v554, 48
    %v579 = vpop.permute.xlu0 %578
    %580 = vrot.lane.b32.xlu0 %v557, 48
    %v581 = vpop.permute.xlu0 %580
    %v584 = vsel %vm285, %v530, %v563
    %v585 = vsel %vm285, %v533, %v565
    %vm586 = vcmask 261120
    %v587 = vsel %vm586, %v584, %v571
    %v588 = vsel %vm586, %v585, %v573
    %vm589 = vcmask 392192
    %v590 = vsel %vm589, %v587, %v579
    %v591 = vsel %vm589, %v588, %v581
    %v592 = vpack.c.bf16 %v591, %v590
    %v593 = vld [vmem:[%s6] sm:$0xf]
    %v594 = vld [vmem:[%s6 + $0x4] sm:$0xf]
    %v595 = vld [vmem:[%s6 + $0x8] sm:$0xf]
    %v596 = vld [vmem:[%s6 + $0xc] sm:$0xf]
    %v597 = vld [vmem:[%s6 + $0x10] sm:$0xf]
    %v598 = vld [vmem:[%s6 + $0x14] sm:$0xf]
    %v599 = vld [vmem:[%s6 + $0x18] sm:$0xf]
    %v600 = vld [vmem:[%s6 + $0x1c] sm:$0xf]
    %v609 = vunpack.c.l.b16 %v593
    %v610 = vunpack.c.l.b16 %v594
    %v611 = vunpack.c.l.b16 %v595
    %v612 = vunpack.c.l.b16 %v596
    %v613 = vunpack.c.l.b16 %v597
    %v614 = vunpack.c.l.b16 %v598
    %v615 = vunpack.c.l.b16 %v599
    %v616 = vunpack.c.l.b16 %v600
    %v617 = vpack.c.b16 %v610, %v609
    %v618 = vpack.c.b16 %v612, %v611
    %v619 = vpack.c.b16 %v614, %v613
    %v620 = vpack.c.b16 %v616, %v615
    %v626 = vsel %vm60, %v592, 0
    %628 = vmatprep.subr.bf16.mxu0 0
    %629 = vmatpush1.bf16.msra.mxu0 %v617
    %630 = vmatprep.subr.bf16.mxu0 0
    %631 = vmatpush1.bf16.msra.mxu0 %v618
    %632 = vmatprep.subr.bf16.mxu0 0
    %633 = vmatpush1.bf16.msra.mxu0 %v619
    %634 = vmatprep.subr.bf16.mxu0 0
    %635 = vmatpush1.bf16.msra.mxu0 %v620
    %636 = vmatprep.subr.bf16.mxu0 0
    %637 = vmatpush1.bf16.msra.mxu0 0
    %638 = vmatprep.subr.bf16.mxu0 0
    %639 = vmatpush1.bf16.msra.mxu0 0
    %640 = vmatprep.subr.bf16.mxu0 0
    %641 = vmatpush1.bf16.msra.mxu0 0
    %642 = vmatprep.subr.bf16.mxu0 0
    %643 = vmatpush1.bf16.msra.mxu0 0
    %644 = vmatprep.subr.bf16.mxu0 0
    %645 = vmatpush1.bf16.msra.mxu0 0
    %646 = vmatprep.subr.bf16.mxu0 0
    %647 = vmatpush1.bf16.msra.mxu0 0
    %648 = vmatprep.subr.bf16.mxu0 0
    %649 = vmatpush1.bf16.msra.mxu0 0
    %650 = vmatprep.subr.bf16.mxu0 0
    %651 = vmatpush1.bf16.msra.mxu0 0
    %652 = vmatprep.subr.bf16.mxu0 0
    %653 = vmatpush1.bf16.msra.mxu0 0
    %654 = vmatprep.subr.bf16.mxu0 0
    %655 = vmatpush1.bf16.msra.mxu0 0
    %656 = vmatprep.subr.bf16.mxu0 0
    %657 = vmatpush1.bf16.msra.mxu0 0
    %658 = vmatprep.subr.bf16.mxu0 0
    %659 = vmatpush1.bf16.msra.mxu0 0
    %660 = vmatprep.mubr.bf16.mxu0 0
    %661 = vmatmul.mubr.bf16.gmra.mrb[0].mxu0 %v626
    %v662 = vpop.f32.mrb[0].mxu0
    %v663 = vadd.f32 0.0, %v662
    %v664 = vpop.f32.mrb[0].mxu0
    %v665 = vpop.f32.mrb[0].mxu0
    %v666 = vadd.f32 0.0, %v665
    %v667 = vpop.f32.mrb[0].mxu0
    %668 = vdwg.mxu0
    %v669 = vadd.f32 %v43, %v663
    %v670 = vadd.f32 %v44, %v666
    %v671 = vld [vmem:[%s7] sm:$0x1]
    %v672 = vmul.f32 %v669, %v669
    %v673 = vmul.f32 %v670, %v670
    %v674 = vsel %vm60, %v672, 0.0
    %675 = vadd.xlane.f32.xlu0 %v674
    %v676 = vpop.xlane.xlu0 %675
    %v677 = vsel %vm60, %v673, 0.0
    %678 = vadd.xlane.f32.xlu0 %v677
    %v679 = vpop.xlane.xlu0 %678
    %v680 = vmul.f32 %v676, %v67
    %v681 = vmul.f32 %v679, %v67
    %v682 = vadd.f32 %v680, 1e-06
    %v683 = vadd.f32 %v681, 1e-06
    %v684 = vrsqrt.pop %v682
    %v685 = vrsqrt.pop %v683
    %v686 = vmul.f32 %v669, %v684
    %v687 = vmul.f32 %v670, %v685
    %v689 = vlaneseq
    %v690 = vshrl.u32 %v689, 7
    %v691 = vsub.s32 0, %v690
    %v692 = vrot.slane %v671, %v691
    %v694 = vmul.f32 %v686, %v692
    %v695 = vmul.f32 %v687, %v692
    %v696 = vpack.c.bf16 %v695, %v694
    %v697 = vld [vmem:[%s8] sm:$0xff]
    %v698 = vld [vmem:[%s8 + $0x8] sm:$0xff]
    %v699 = vld [vmem:[%s8 + $0x10] sm:$0xff]
    %v700 = vld [vmem:[%s8 + $0x18] sm:$0xff]
    %v701 = vld [vmem:[%s8 + $0x20] sm:$0xff]
    %v702 = vld [vmem:[%s8 + $0x28] sm:$0xff]
    %v703 = vld [vmem:[%s8 + $0x30] sm:$0xff]
    %v704 = vld [vmem:[%s8 + $0x38] sm:$0xff]
    %v713 = vunpack.c.l.b16 %v697
    %v714 = vunpack.c.h.b16 %v697
    %v715 = vunpack.c.l.b16 %v698
    %v716 = vunpack.c.h.b16 %v698
    %v717 = vunpack.c.l.b16 %v699
    %v718 = vunpack.c.h.b16 %v699
    %v719 = vunpack.c.l.b16 %v700
    %v720 = vunpack.c.h.b16 %v700
    %v721 = vunpack.c.l.b16 %v701
    %v722 = vunpack.c.h.b16 %v701
    %v723 = vunpack.c.l.b16 %v702
    %v724 = vunpack.c.h.b16 %v702
    %v725 = vunpack.c.l.b16 %v703
    %v726 = vunpack.c.h.b16 %v703
    %v727 = vunpack.c.l.b16 %v704
    %v728 = vunpack.c.h.b16 %v704
    %v729 = vpack.c.b16 %v715, %v713
    %v730 = vpack.c.b16 %v716, %v714
    %v731 = vpack.c.b16 %v719, %v717
    %v732 = vpack.c.b16 %v720, %v718
    %v733 = vpack.c.b16 %v723, %v721
    %v734 = vpack.c.b16 %v724, %v722
    %v735 = vpack.c.b16 %v727, %v725
    %v736 = vpack.c.b16 %v728, %v726
    %v746 = vsel %vm60, %v696, 0
    %748 = vmatprep.subr.bf16.mxu0 %v730
    %749 = vmatpush1.bf16.msra.mxu0 %v729
    %750 = vmatprep.subr.bf16.mxu0 %v732
    %751 = vmatpush1.bf16.msra.mxu0 %v731
    %752 = vmatprep.subr.bf16.mxu0 %v734
    %753 = vmatpush1.bf16.msra.mxu0 %v733
    %754 = vmatprep.subr.bf16.mxu0 %v736
    %755 = vmatpush1.bf16.msra.mxu0 %v735
    %756 = vmatprep.subr.bf16.mxu0 0
    %757 = vmatpush1.bf16.msra.mxu0 0
    %758 = vmatprep.subr.bf16.mxu0 0
    %759 = vmatpush1.bf16.msra.mxu0 0
    %760 = vmatprep.subr.bf16.mxu0 0
    %761 = vmatpush1.bf16.msra.mxu0 0
    %762 = vmatprep.subr.bf16.mxu0 0
    %763 = vmatpush1.bf16.msra.mxu0 0
    %764 = vmatprep.subr.bf16.mxu0 0
    %765 = vmatpush1.bf16.msra.mxu0 0
    %766 = vmatprep.subr.bf16.mxu0 0
    %767 = vmatpush1.bf16.msra.mxu0 0
    %768 = vmatprep.subr.bf16.mxu0 0
    %769 = vmatpush1.bf16.msra.mxu0 0
    %770 = vmatprep.subr.bf16.mxu0 0
    %771 = vmatpush1.bf16.msra.mxu0 0
    %772 = vmatprep.subr.bf16.mxu0 0
    %773 = vmatpush1.bf16.msra.mxu0 0
    %774 = vmatprep.subr.bf16.mxu0 0
    %775 = vmatpush1.bf16.msra.mxu0 0
    %776 = vmatprep.subr.bf16.mxu0 0
    %777 = vmatpush1.bf16.msra.mxu0 0
    %778 = vmatprep.subr.bf16.mxu0 0
    %779 = vmatpush1.bf16.msra.mxu0 0
    %780 = vmatprep.mubr.bf16.mxu0 0
    %781 = vmatmul.mubr.bf16.gmra.mrb[0].mxu0 %v746
    %v782 = vpop.f32.mrb[0].mxu0
    %v783 = vadd.f32 0.0, %v782
    %v784 = vpop.f32.mrb[0].mxu0
    %v785 = vadd.f32 0.0, %v784
    %v786 = vpop.f32.mrb[0].mxu0
    %v787 = vadd.f32 0.0, %v786
    %v788 = vpop.f32.mrb[0].mxu0
    %v789 = vadd.f32 0.0, %v788
    %790 = vdwg.mxu0
    %v791 = vsub.f32 0.0, %v783
    %v792 = vsub.f32 0.0, %v787
    %v793 = vmul.f32 %v791, 1.442695
    %v794 = vpow.pop %v793
    %v795 = vmul.f32 %v792, 1.442695
    %v796 = vpow.pop %v795
    %v797 = vadd.f32 %v794, 1.0
    %v798 = vadd.f32 %v796, 1.0
    %v799 = vrcp.pop %v797
    %v800 = vmul.f32 1.0, %v799
    %v801 = vrcp.pop %v798
    %v802 = vmul.f32 1.0, %v801
    %v803 = vmul.f32 %v783, %v800
    %v804 = vmul.f32 %v787, %v802
    %v805 = vmul.f32 %v803, %v785
    %v806 = vmul.f32 %v804, %v789
    %v807 = vpack.c.bf16 %v806, %v805
    %v808 = vld [vmem:[%s9] sm:$0xf]
    %v809 = vld [vmem:[%s9 + $0x4] sm:$0xf]
    %v810 = vld [vmem:[%s9 + $0x8] sm:$0xf]
    %v811 = vld [vmem:[%s9 + $0xc] sm:$0xf]
    %v812 = vld [vmem:[%s9 + $0x10] sm:$0xf]
    %v813 = vld [vmem:[%s9 + $0x14] sm:$0xf]
    %v814 = vld [vmem:[%s9 + $0x18] sm:$0xf]
    %v815 = vld [vmem:[%s9 + $0x1c] sm:$0xf]
    %v816 = vld [vmem:[%s9 + $0x20] sm:$0xf]
    %v817 = vld [vmem:[%s9 + $0x24] sm:$0xf]
    %v818 = vld [vmem:[%s9 + $0x28] sm:$0xf]
    %v819 = vld [vmem:[%s9 + $0x2c] sm:$0xf]
    %v820 = vld [vmem:[%s9 + $0x30] sm:$0xf]
    %v821 = vld [vmem:[%s9 + $0x34] sm:$0xf]
    %v822 = vld [vmem:[%s9 + $0x38] sm:$0xf]
    %v823 = vld [vmem:[%s9 + $0x3c] sm:$0xf]
    %v840 = vunpack.c.l.b16 %v808
    %v841 = vunpack.c.l.b16 %v809
    %v842 = vunpack.c.l.b16 %v810
    %v843 = vunpack.c.l.b16 %v811
    %v844 = vunpack.c.l.b16 %v812
    %v845 = vunpack.c.l.b16 %v813
    %v846 = vunpack.c.l.b16 %v814
    %v847 = vunpack.c.l.b16 %v815
    %v848 = vunpack.c.l.b16 %v816
    %v849 = vunpack.c.l.b16 %v817
    %v850 = vunpack.c.l.b16 %v818
    %v851 = vunpack.c.l.b16 %v819
    %v852 = vunpack.c.l.b16 %v820
    %v853 = vunpack.c.l.b16 %v821
    %v854 = vunpack.c.l.b16 %v822
    %v855 = vunpack.c.l.b16 %v823
    %v856 = vpack.c.b16 %v841, %v840
    %v857 = vpack.c.b16 %v843, %v842
    %v858 = vpack.c.b16 %v845, %v844
    %v859 = vpack.c.b16 %v847, %v846
    %v860 = vpack.c.b16 %v849, %v848
    %v861 = vpack.c.b16 %v851, %v850
    %v862 = vpack.c.b16 %v853, %v852
    %v863 = vpack.c.b16 %v855, %v854
    %872 = vmatprep.subr.bf16.mxu0 0
    %873 = vmatpush1.bf16.msra.mxu0 %v856
    %874 = vmatprep.subr.bf16.mxu0 0
    %875 = vmatpush1.bf16.msra.mxu0 %v857
    %876 = vmatprep.subr.bf16.mxu0 0
    %877 = vmatpush1.bf16.msra.mxu0 %v858
    %878 = vmatprep.subr.bf16.mxu0 0
    %879 = vmatpush1.bf16.msra.mxu0 %v859
    %880 = vmatprep.subr.bf16.mxu0 0
    %881 = vmatpush1.bf16.msra.mxu0 %v860
    %882 = vmatprep.subr.bf16.mxu0 0
    %883 = vmatpush1.bf16.msra.mxu0 %v861
    %884 = vmatprep.subr.bf16.mxu0 0
    %885 = vmatpush1.bf16.msra.mxu0 %v862
    %886 = vmatprep.subr.bf16.mxu0 0
    %887 = vmatpush1.bf16.msra.mxu0 %v863
    %888 = vmatprep.subr.bf16.mxu0 0
    %889 = vmatpush1.bf16.msra.mxu0 0
    %890 = vmatprep.subr.bf16.mxu0 0
    %891 = vmatpush1.bf16.msra.mxu0 0
    %892 = vmatprep.subr.bf16.mxu0 0
    %893 = vmatpush1.bf16.msra.mxu0 0
    %894 = vmatprep.subr.bf16.mxu0 0
    %895 = vmatpush1.bf16.msra.mxu0 0
    %896 = vmatprep.subr.bf16.mxu0 0
    %897 = vmatpush1.bf16.msra.mxu0 0
    %898 = vmatprep.subr.bf16.mxu0 0
    %899 = vmatpush1.bf16.msra.mxu0 0
    %900 = vmatprep.subr.bf16.mxu0 0
    %901 = vmatpush1.bf16.msra.mxu0 0
    %902 = vmatprep.subr.bf16.mxu0 0
    %903 = vmatpush1.bf16.msra.mxu0 0
    %904 = vmatprep.mubr.bf16.mxu0 0
    %905 = vmatmul.mubr.bf16.gmra.mrb[0].mxu0 %v807
    %v906 = vpop.f32.mrb[0].mxu0
    %v907 = vadd.f32 0.0, %v906
    %v908 = vpop.f32.mrb[0].mxu0
    %v909 = vpop.f32.mrb[0].mxu0
    %v910 = vadd.f32 0.0, %v909
    %v911 = vpop.f32.mrb[0].mxu0
    %912 = vdwg.mxu0
    %v913 = vadd.f32 %v669, %v907
    %v914 = vadd.f32 %v670, %v910
    %s915 = scalar_lea.vmem %s4, 1
    %v916 = vld [vmem:[%s915] sm:$0x1]
    %v917 = vmul.f32 %v913, %v913
    %v918 = vmul.f32 %v914, %v914
    %v919 = vsel %vm60, %v917, 0.0
    %920 = vadd.xlane.f32.xlu0 %v919
    %v921 = vpop.xlane.xlu0 %920
    %v922 = vsel %vm60, %v918, 0.0
    %923 = vadd.xlane.f32.xlu0 %v922
    %v924 = vpop.xlane.xlu0 %923
    %v925 = vmul.f32 %v921, %v67
    %v926 = vmul.f32 %v924, %v67
    %v927 = vadd.f32 %v925, 1e-06
    %v928 = vadd.f32 %v926, 1e-06
    %v929 = vrsqrt.pop %v927
    %v930 = vrsqrt.pop %v928
    %v931 = vmul.f32 %v913, %v929
    %v932 = vmul.f32 %v914, %v930
    %v934 = vlaneseq
    %v935 = vshrl.u32 %v934, 7
    %v936 = vsub.s32 0, %v935
    %v937 = vrot.slane %v916, %v936
    %v939 = vmul.f32 %v931, %v937
    %v940 = vmul.f32 %v932, %v937
    %v941 = vpack.c.bf16 %v940, %v939
    %s942 = scalar_lea.vmem %s5, 96
    %v943 = vld [vmem:[%s942] sm:$0xff]
    %v944 = vld [vmem:[%s942 + $0x8] sm:$0xf]
    %v945 = vld [vmem:[%s942 + $0xc] sm:$0xff]
    %v946 = vld [vmem:[%s942 + $0x14] sm:$0xf]
    %v947 = vld [vmem:[%s942 + $0x18] sm:$0xff]
    %v948 = vld [vmem:[%s942 + $0x20] sm:$0xf]
    %v949 = vld [vmem:[%s942 + $0x24] sm:$0xff]
    %v950 = vld [vmem:[%s942 + $0x2c] sm:$0xf]
    %v951 = vld [vmem:[%s942 + $0x30] sm:$0xff]
    %v952 = vld [vmem:[%s942 + $0x38] sm:$0xf]
    %v953 = vld [vmem:[%s942 + $0x3c] sm:$0xff]
    %v954 = vld [vmem:[%s942 + $0x44] sm:$0xf]
    %v955 = vld [vmem:[%s942 + $0x48] sm:$0xff]
    %v956 = vld [vmem:[%s942 + $0x50] sm:$0xf]
    %v957 = vld [vmem:[%s942 + $0x54] sm:$0xff]
    %v958 = vld [vmem:[%s942 + $0x5c] sm:$0xf]
    %v975 = vunpack.c.l.b16 %v943
    %v976 = vunpack.c.h.b16 %v943
    %v977 = vunpack.c.l.b16 %v944
    %v978 = vunpack.c.l.b16 %v945
    %v979 = vunpack.c.h.b16 %v945
    %v980 = vunpack.c.l.b16 %v946
    %v981 = vunpack.c.l.b16 %v947
    %v982 = vunpack.c.h.b16 %v947
    %v983 = vunpack.c.l.b16 %v948
    %v984 = vunpack.c.l.b16 %v949
    %v985 = vunpack.c.h.b16 %v949
    %v986 = vunpack.c.l.b16 %v950
    %v987 = vunpack.c.l.b16 %v951
    %v988 = vunpack.c.h.b16 %v951
    %v989 = vunpack.c.l.b16 %v952
    %v990 = vunpack.c.l.b16 %v953
    %v991 = vunpack.c.h.b16 %v953
    %v992 = vunpack.c.l.b16 %v954
    %v993 = vunpack.c.l.b16 %v955
    %v994 = vunpack.c.h.b16 %v955
    %v995 = vunpack.c.l.b16 %v956
    %v996 = vunpack.c.l.b16 %v957
    %v997 = vunpack.c.h.b16 %v957
    %v998 = vunpack.c.l.b16 %v958
    %v999 = vpack.c.b16 %v978, %v975
    %v1000 = vpack.c.b16 %v979, %v976
    %v1001 = vpack.c.b16 %v980, %v977
    %v1002 = vpack.c.b16 %v984, %v981
    %v1003 = vpack.c.b16 %v985, %v982
    %v1004 = vpack.c.b16 %v986, %v983
    %v1005 = vpack.c.b16 %v990, %v987
    %v1006 = vpack.c.b16 %v991, %v988
    %v1007 = vpack.c.b16 %v992, %v989
    %v1008 = vpack.c.b16 %v996, %v993
    %v1009 = vpack.c.b16 %v997, %v994
    %v1010 = vpack.c.b16 %v998, %v995
    %v1024 = vsel %vm60, %v941, 0
    %1026 = vmatprep.subr.bf16.mxu0 %v1000
    %1027 = vmatpush1.bf16.msra.mxu0 %v999
    %1028 = vmatprep.subr.bf16.mxu0 %v1003
    %1029 = vmatpush1.bf16.msra.mxu0 %v1002
    %1030 = vmatprep.subr.bf16.mxu0 %v1006
    %1031 = vmatpush1.bf16.msra.mxu0 %v1005
    %1032 = vmatprep.subr.bf16.mxu0 %v1009
    %1033 = vmatpush1.bf16.msra.mxu0 %v1008
    %1034 = vmatprep.subr.bf16.mxu0 0
    %1035 = vmatpush1.bf16.msra.mxu0 0
    %1036 = vmatprep.subr.bf16.mxu0 0
    %1037 = vmatpush1.bf16.msra.mxu0 0
    %1038 = vmatprep.subr.bf16.mxu0 0
    %1039 = vmatpush1.bf16.msra.mxu0 0
    %1040 = vmatprep.subr.bf16.mxu0 0
    %1041 = vmatpush1.bf16.msra.mxu0 0
    %1042 = vmatprep.subr.bf16.mxu0 0
    %1043 = vmatpush1.bf16.msra.mxu0 0
    %1044 = vmatprep.subr.bf16.mxu0 0
    %1045 = vmatpush1.bf16.msra.mxu0 0
    %1046 = vmatprep.subr.bf16.mxu0 0
    %1047 = vmatpush1.bf16.msra.mxu0 0
    %1048 = vmatprep.subr.bf16.mxu0 0
    %1049 = vmatpush1.bf16.msra.mxu0 0
    %1050 = vmatprep.subr.bf16.mxu0 0
    %1051 = vmatpush1.bf16.msra.mxu0 0
    %1052 = vmatprep.subr.bf16.mxu0 0
    %1053 = vmatpush1.bf16.msra.mxu0 0
    %1054 = vmatprep.subr.bf16.mxu0 0
    %1055 = vmatpush1.bf16.msra.mxu0 0
    %1056 = vmatprep.subr.bf16.mxu0 0
    %1057 = vmatpush1.bf16.msra.mxu0 0
    %1058 = vmatprep.mubr.bf16.mxu0 0
    %1059 = vmatmul.mubr.bf16.gmra.mrb[0].mxu0 %v1024
    %v1060 = vpop.f32.mrb[0].mxu0
    %v1061 = vadd.f32 0.0, %v1060
    %v1062 = vpop.f32.mrb[0].mxu0
    %v1063 = vadd.f32 0.0, %v1062
    %v1064 = vpop.f32.mrb[0].mxu0
    %v1065 = vadd.f32 0.0, %v1064
    %v1066 = vpop.f32.mrb[0].mxu0
    %v1067 = vadd.f32 0.0, %v1066
    %1068 = vdwg.mxu0
    %1069 = vmatprep.subr.bf16.mxu0 0
    %1070 = vmatpush1.bf16.msra.mxu0 %v1001
    %1071 = vmatprep.subr.bf16.mxu0 0
    %1072 = vmatpush1.bf16.msra.mxu0 %v1004
    %1073 = vmatprep.subr.bf16.mxu0 0
    %1074 = vmatpush1.bf16.msra.mxu0 %v1007
    %1075 = vmatprep.subr.bf16.mxu0 0
    %1076 = vmatpush1.bf16.msra.mxu0 %v1010
    %1077 = vmatprep.subr.bf16.mxu0 0
    %1078 = vmatpush1.bf16.msra.mxu0 0
    %1079 = vmatprep.subr.bf16.mxu0 0
    %1080 = vmatpush1.bf16.msra.mxu0 0
    %1081 = vmatprep.subr.bf16.mxu0 0
    %1082 = vmatpush1.bf16.msra.mxu0 0
    %1083 = vmatprep.subr.bf16.mxu0 0
    %1084 = vmatpush1.bf16.msra.mxu0 0
    %1085 = vmatprep.subr.bf16.mxu0 0
    %1086 = vmatpush1.bf16.msra.mxu0 0
    %1087 = vmatprep.subr.bf16.mxu0 0
    %1088 = vmatpush1.bf16.msra.mxu0 0
    %1089 = vmatprep.subr.bf16.mxu0 0
    %1090 = vmatpush1.bf16.msra.mxu0 0
    %1091 = vmatprep.subr.bf16.mxu0 0
    %1092 = vmatpush1.bf16.msra.mxu0 0
    %1093 = vmatprep.subr.bf16.mxu0 0
    %1094 = vmatpush1.bf16.msra.mxu0 0
    %1095 = vmatprep.subr.bf16.mxu0 0
    %1096 = vmatpush1.bf16.msra.mxu0 0
    %1097 = vmatprep.subr.bf16.mxu0 0
    %1098 = vmatpush1.bf16.msra.mxu0 0
    %1099 = vmatprep.subr.bf16.mxu0 0
    %1100 = vmatpush1.bf16.msra.mxu0 0
    %1101 = vmatprep.mubr.bf16.mxu0 0
    %1102 = vmatmul.mubr.bf16.gmra.mrb[0].mxu0 %v1024
    %v1103 = vpop.f32.mrb[0].mxu0
    %v1104 = vadd.f32 0.0, %v1103
    %v1105 = vpop.f32.mrb[0].mxu0
    %v1106 = vpop.f32.mrb[0].mxu0
    %v1107 = vadd.f32 0.0, %v1106
    %v1108 = vpop.f32.mrb[0].mxu0
    %1109 = vdwg.mxu0
    %v1110 = vmul.f32 %v1061, %v45
    %v1111 = vmul.f32 %v1065, %v46
    %v1112 = vmul.f32 %v1063, %v47
    %v1113 = vmul.f32 %v1067, %v48
    %v1114 = vadd.f32 %v1110, %v1112
    %v1115 = vadd.f32 %v1111, %v1113
    %v1116 = vpack.c.bf16 %v1115, %v1114
    %v1117 = vpack.c.bf16 %v1107, %v1104
    %1119 = vrot.lane.b32.xlu0 %v1116, 112
    %v1120 = vpop.permute.xlu0 %1119
    %1121 = vrot.lane.b32.xlu0 %v1116, 96
    %v1122 = vpop.permute.xlu0 %1121
    %1123 = vrot.lane.b32.xlu0 %v1116, 80
    %v1124 = vpop.permute.xlu0 %1123
    %1126 = vrot.lane.b32.xlu0 %v1117, 112
    %v1127 = vpop.permute.xlu0 %1126
    %1129 = vrot.lane.b32.xlu0 %v1117, 96
    %v1130 = vpop.permute.xlu0 %1129
    %1132 = vrot.lane.b32.xlu0 %v1117, 80
    %v1133 = vpop.permute.xlu0 %1132
    %1135 = vrot.lane.b32.xlu0 %v1116, 64
    %v1136 = vpop.permute.xlu0 %1135
    %1137 = vrot.lane.b32.xlu0 %v1120, 64
    %v1138 = vpop.permute.xlu0 %1137
    %1139 = vrot.lane.b32.xlu0 %v1122, 64
    %v1140 = vpop.permute.xlu0 %1139
    %1141 = vrot.lane.b32.xlu0 %v1124, 64
    %v1142 = vpop.permute.xlu0 %1141
    %v1144 = vsel %vm285, %v1116, 0
    %v1147 = vsel %vm285, %v1120, 0
    %v1150 = vsel %vm285, %v1122, 0
    %v1153 = vsel %vm285, %v1124, 0
    %v1156 = vsel %vm285, %v1136, 0
    %v1159 = vsel %vm285, %v1138, 0
    %v1162 = vsel %vm285, %v1140, 0
    %v1165 = vsel %vm285, %v1142, 0
    %1167 = vmatprep.subr.bf16.mxu0 0
    %1168 = vmatpush1.bf16.xpose.msra.mxu0 %v1156
    %1169 = vmatprep.subr.bf16.mxu0 0
    %1170 = vmatpush1.bf16.xpose.msra.mxu0 %v1159
    %1171 = vmatprep.subr.bf16.mxu0 0
    %1172 = vmatpush1.bf16.xpose.msra.mxu0 %v1162
    %1173 = vmatprep.subr.bf16.mxu0 0
    %1174 = vmatpush1.bf16.xpose.msra.mxu0 %v1165
    %1175 = vmatprep.subr.bf16.mxu0 0
    %1176 = vmatpush1.bf16.xpose.msra.mxu0 0
    %1177 = vmatprep.subr.bf16.mxu0 0
    %1178 = vmatpush1.bf16.xpose.msra.mxu0 0
    %1179 = vmatprep.subr.bf16.mxu0 0
    %1180 = vmatpush1.bf16.xpose.msra.mxu0 0
    %1181 = vmatprep.subr.bf16.mxu0 0
    %1182 = vmatpush1.bf16.xpose.msra.mxu0 0
    %1183 = vmatprep.subr.bf16.mxu0 0
    %1184 = vmatpush1.bf16.xpose.msra.mxu0 0
    %1185 = vmatprep.subr.bf16.mxu0 0
    %1186 = vmatpush1.bf16.xpose.msra.mxu0 0
    %1187 = vmatprep.subr.bf16.mxu0 0
    %1188 = vmatpush1.bf16.xpose.msra.mxu0 0
    %1189 = vmatprep.subr.bf16.mxu0 0
    %1190 = vmatpush1.bf16.xpose.msra.mxu0 0
    %1191 = vmatprep.subr.bf16.mxu0 0
    %1192 = vmatpush1.bf16.xpose.msra.mxu0 0
    %1193 = vmatprep.subr.bf16.mxu0 0
    %1194 = vmatpush1.bf16.xpose.msra.mxu0 0
    %1195 = vmatprep.subr.bf16.mxu0 0
    %1196 = vmatpush1.bf16.xpose.msra.mxu0 0
    %1197 = vmatprep.subr.bf16.mxu0 0
    %1198 = vmatpush1.bf16.xpose.msra.mxu0 0
    %1199 = vmatprep.mubr.bf16.mxu0 0
    %1200 = vmatmul.mubr.bf16.gmra.mrb[0].mxu0 %v1144
    %v1201 = vpop.f32.mrb[0].mxu0
    %v1202 = vadd.f32 0.0, %v1201
    %v1203 = vpop.f32.mrb[0].mxu0
    %v1204 = vpop.f32.mrb[0].mxu0
    %v1205 = vadd.f32 0.0, %v1204
    %v1206 = vpop.f32.mrb[0].mxu0
    %1207 = vmatprep.mubr.bf16.mxu0 0
    %1208 = vmatmul.mubr.bf16.gmra.mrb[0].mxu0 %v1147
    %v1209 = vpop.f32.mrb[0].mxu0
    %v1210 = vadd.f32 0.0, %v1209
    %v1211 = vpop.f32.mrb[0].mxu0
    %v1212 = vpop.f32.mrb[0].mxu0
    %v1213 = vadd.f32 0.0, %v1212
    %v1214 = vpop.f32.mrb[0].mxu0
    %1215 = vmatprep.mubr.bf16.mxu0 0
    %1216 = vmatmul.mubr.bf16.gmra.mrb[0].mxu0 %v1150
    %v1217 = vpop.f32.mrb[0].mxu0
    %v1218 = vadd.f32 0.0, %v1217
    %v1219 = vpop.f32.mrb[0].mxu0
    %v1220 = vpop.f32.mrb[0].mxu0
    %v1221 = vadd.f32 0.0, %v1220
    %v1222 = vpop.f32.mrb[0].mxu0
    %1223 = vmatprep.mubr.bf16.mxu0 0
    %1224 = vmatmul.mubr.bf16.gmra.mrb[0].mxu0 %v1153
    %v1225 = vpop.f32.mrb[0].mxu0
    %v1226 = vadd.f32 0.0, %v1225
    %v1227 = vpop.f32.mrb[0].mxu0
    %v1228 = vpop.f32.mrb[0].mxu0
    %v1229 = vadd.f32 0.0, %v1228
    %v1230 = vpop.f32.mrb[0].mxu0
    %1231 = vdwg.mxu0
    %v1232 = vmul.f32 %v1202, 0.25
    %v1233 = vmul.f32 %v1205, 0.25
    %v1234 = vmul.f32 %v1210, 0.25
    %v1235 = vmul.f32 %v1213, 0.25
    %v1236 = vmul.f32 %v1218, 0.25
    %v1237 = vmul.f32 %v1221, 0.25
    %v1238 = vmul.f32 %v1226, 0.25
    %v1239 = vmul.f32 %v1229, 0.25
    %v1240 = vadd.f32 %v1232, %v49
    %v1241 = vadd.f32 %v1233, %v50
    %v1242 = vadd.f32 %v1234, %v51
    %v1243 = vadd.f32 %v1235, %v52
    %v1244 = vadd.f32 %v1236, %v53
    %v1245 = vadd.f32 %v1237, %v54
    %v1246 = vadd.f32 %v1238, %v55
    %v1247 = vadd.f32 %v1239, %v56
    %v1248 = vsel %vm60, %v1240, -inf
    %1249 = vmax.xlane.f32.xlu0 %v1248
    %v1250 = vpop.xlane.xlu0 %1249
    %v1251 = vsel %vm60, %v1241, -inf
    %1252 = vmax.xlane.f32.xlu0 %v1251
    %v1253 = vpop.xlane.xlu0 %1252
    %v1254 = vsel %vm60, %v1242, -inf
    %1255 = vmax.xlane.f32.xlu0 %v1254
    %v1256 = vpop.xlane.xlu0 %1255
    %v1257 = vsel %vm60, %v1243, -inf
    %1258 = vmax.xlane.f32.xlu0 %v1257
    %v1259 = vpop.xlane.xlu0 %1258
    %v1260 = vsel %vm60, %v1244, -inf
    %1261 = vmax.xlane.f32.xlu0 %v1260
    %v1262 = vpop.xlane.xlu0 %1261
    %v1263 = vsel %vm60, %v1245, -inf
    %1264 = vmax.xlane.f32.xlu0 %v1263
    %v1265 = vpop.xlane.xlu0 %1264
    %v1266 = vsel %vm60, %v1246, -inf
    %1267 = vmax.xlane.f32.xlu0 %v1266
    %v1268 = vpop.xlane.xlu0 %1267
    %v1269 = vsel %vm60, %v1247, -inf
    %1270 = vmax.xlane.f32.xlu0 %v1269
    %v1271 = vpop.xlane.xlu0 %1270
    %v1272 = vsub.f32 %v1240, %v1250
    %v1273 = vsub.f32 %v1241, %v1253
    %v1274 = vsub.f32 %v1242, %v1256
    %v1275 = vsub.f32 %v1243, %v1259
    %v1276 = vsub.f32 %v1244, %v1262
    %v1277 = vsub.f32 %v1245, %v1265
    %v1278 = vsub.f32 %v1246, %v1268
    %v1279 = vsub.f32 %v1247, %v1271
    %v1280 = vmul.f32 %v1272, 1.442695
    %v1281 = vpow.pop %v1280
    %v1282 = vmul.f32 %v1273, 1.442695
    %v1283 = vpow.pop %v1282
    %v1284 = vmul.f32 %v1274, 1.442695
    %v1285 = vpow.pop %v1284
    %v1286 = vmul.f32 %v1275, 1.442695
    %v1287 = vpow.pop %v1286
    %v1288 = vmul.f32 %v1276, 1.442695
    %v1289 = vpow.pop %v1288
    %v1290 = vmul.f32 %v1277, 1.442695
    %v1291 = vpow.pop %v1290
    %v1292 = vmul.f32 %v1278, 1.442695
    %v1293 = vpow.pop %v1292
    %v1294 = vmul.f32 %v1279, 1.442695
    %v1295 = vpow.pop %v1294
    %v1296 = vsel %vm60, %v1281, 0.0
    %1297 = vadd.xlane.f32.xlu0 %v1296
    %v1298 = vpop.xlane.xlu0 %1297
    %v1299 = vsel %vm60, %v1283, 0.0
    %1300 = vadd.xlane.f32.xlu0 %v1299
    %v1301 = vpop.xlane.xlu0 %1300
    %v1302 = vsel %vm60, %v1285, 0.0
    %1303 = vadd.xlane.f32.xlu0 %v1302
    %v1304 = vpop.xlane.xlu0 %1303
    %v1305 = vsel %vm60, %v1287, 0.0
    %1306 = vadd.xlane.f32.xlu0 %v1305
    %v1307 = vpop.xlane.xlu0 %1306
    %v1308 = vsel %vm60, %v1289, 0.0
    %1309 = vadd.xlane.f32.xlu0 %v1308
    %v1310 = vpop.xlane.xlu0 %1309
    %v1311 = vsel %vm60, %v1291, 0.0
    %1312 = vadd.xlane.f32.xlu0 %v1311
    %v1313 = vpop.xlane.xlu0 %1312
    %v1314 = vsel %vm60, %v1293, 0.0
    %1315 = vadd.xlane.f32.xlu0 %v1314
    %v1316 = vpop.xlane.xlu0 %1315
    %v1317 = vsel %vm60, %v1295, 0.0
    %1318 = vadd.xlane.f32.xlu0 %v1317
    %v1319 = vpop.xlane.xlu0 %1318
    %v1320 = vrcp.pop %v1298
    %v1321 = vmul.f32 %v1281, %v1320
    %v1322 = vrcp.pop %v1301
    %v1323 = vmul.f32 %v1283, %v1322
    %v1324 = vrcp.pop %v1304
    %v1325 = vmul.f32 %v1285, %v1324
    %v1326 = vrcp.pop %v1307
    %v1327 = vmul.f32 %v1287, %v1326
    %v1328 = vrcp.pop %v1310
    %v1329 = vmul.f32 %v1289, %v1328
    %v1330 = vrcp.pop %v1313
    %v1331 = vmul.f32 %v1291, %v1330
    %v1332 = vrcp.pop %v1316
    %v1333 = vmul.f32 %v1293, %v1332
    %v1334 = vrcp.pop %v1319
    %v1335 = vmul.f32 %v1295, %v1334
    %v1336 = vpack.c.bf16 %v1323, %v1321
    %v1337 = vpack.c.bf16 %v1327, %v1325
    %v1338 = vpack.c.bf16 %v1331, %v1329
    %v1339 = vpack.c.bf16 %v1335, %v1333
    %v1341 = vsel %vm60, %v1336, 0
    %v1344 = vsel %vm60, %v1337, 0
    %v1347 = vsel %vm60, %v1338, 0
    %v1350 = vsel %vm60, %v1339, 0
    %1352 = vmatprep.subr.bf16.mxu0 0
    %1353 = vmatpush1.bf16.msra.mxu0 %v1117
    %1354 = vmatprep.subr.bf16.mxu0 0
    %1355 = vmatpush1.bf16.msra.mxu0 %v1127
    %1356 = vmatprep.subr.bf16.mxu0 0
    %1357 = vmatpush1.bf16.msra.mxu0 %v1130
    %1358 = vmatprep.subr.bf16.mxu0 0
    %1359 = vmatpush1.bf16.msra.mxu0 %v1133
    %1360 = vmatprep.subr.bf16.mxu0 0
    %1361 = vmatpush1.bf16.msra.mxu0 0
    %1362 = vmatprep.subr.bf16.mxu0 0
    %1363 = vmatpush1.bf16.msra.mxu0 0
    %1364 = vmatprep.subr.bf16.mxu0 0
    %1365 = vmatpush1.bf16.msra.mxu0 0
    %1366 = vmatprep.subr.bf16.mxu0 0
    %1367 = vmatpush1.bf16.msra.mxu0 0
    %1368 = vmatprep.subr.bf16.mxu0 0
    %1369 = vmatpush1.bf16.msra.mxu0 0
    %1370 = vmatprep.subr.bf16.mxu0 0
    %1371 = vmatpush1.bf16.msra.mxu0 0
    %1372 = vmatprep.subr.bf16.mxu0 0
    %1373 = vmatpush1.bf16.msra.mxu0 0
    %1374 = vmatprep.subr.bf16.mxu0 0
    %1375 = vmatpush1.bf16.msra.mxu0 0
    %1376 = vmatprep.subr.bf16.mxu0 0
    %1377 = vmatpush1.bf16.msra.mxu0 0
    %1378 = vmatprep.subr.bf16.mxu0 0
    %1379 = vmatpush1.bf16.msra.mxu0 0
    %1380 = vmatprep.subr.bf16.mxu0 0
    %1381 = vmatpush1.bf16.msra.mxu0 0
    %1382 = vmatprep.subr.bf16.mxu0 0
    %1383 = vmatpush1.bf16.msra.mxu0 0
    %1384 = vmatprep.mubr.bf16.mxu0 0
    %1385 = vmatmul.mubr.bf16.gmra.mrb[0].mxu0 %v1341
    %v1386 = vpop.f32.mrb[0].mxu0
    %v1387 = vadd.f32 0.0, %v1386
    %v1388 = vpop.f32.mrb[0].mxu0
    %v1389 = vpop.f32.mrb[0].mxu0
    %v1390 = vadd.f32 0.0, %v1389
    %v1391 = vpop.f32.mrb[0].mxu0
    %1392 = vmatprep.mubr.bf16.mxu0 0
    %1393 = vmatmul.mubr.bf16.gmra.mrb[0].mxu0 %v1344
    %v1394 = vpop.f32.mrb[0].mxu0
    %v1395 = vadd.f32 0.0, %v1394
    %v1396 = vpop.f32.mrb[0].mxu0
    %v1397 = vpop.f32.mrb[0].mxu0
    %v1398 = vadd.f32 0.0, %v1397
    %v1399 = vpop.f32.mrb[0].mxu0
    %1400 = vmatprep.mubr.bf16.mxu0 0
    %1401 = vmatmul.mubr.bf16.gmra.mrb[0].mxu0 %v1347
    %v1402 = vpop.f32.mrb[0].mxu0
    %v1403 = vadd.f32 0.0, %v1402
    %v1404 = vpop.f32.mrb[0].mxu0
    %v1405 = vpop.f32.mrb[0].mxu0
    %v1406 = vadd.f32 0.0, %v1405
    %v1407 = vpop.f32.mrb[0].mxu0
    %1408 = vmatprep.mubr.bf16.mxu0 0
    %1409 = vmatmul.mubr.bf16.gmra.mrb[0].mxu0 %v1350
    %v1410 = vpop.f32.mrb[0].mxu0
    %v1411 = vadd.f32 0.0, %v1410
    %v1412 = vpop.f32.mrb[0].mxu0
    %v1413 = vpop.f32.mrb[0].mxu0
    %v1414 = vadd.f32 0.0, %v1413
    %v1415 = vpop.f32.mrb[0].mxu0
    %1416 = vdwg.mxu0
    %1419 = vrot.lane.b32.xlu0 %v1395, 16
    %v1420 = vpop.permute.xlu0 %1419
    %1421 = vrot.lane.b32.xlu0 %v1398, 16
    %v1422 = vpop.permute.xlu0 %1421
    %1427 = vrot.lane.b32.xlu0 %v1403, 32
    %v1428 = vpop.permute.xlu0 %1427
    %1429 = vrot.lane.b32.xlu0 %v1406, 32
    %v1430 = vpop.permute.xlu0 %1429
    %1435 = vrot.lane.b32.xlu0 %v1411, 48
    %v1436 = vpop.permute.xlu0 %1435
    %1437 = vrot.lane.b32.xlu0 %v1414, 48
    %v1438 = vpop.permute.xlu0 %1437
    %v1441 = vsel %vm285, %v1387, %v1420
    %v1442 = vsel %vm285, %v1390, %v1422
    %v1443 = vsel %vm586, %v1441, %v1428
    %v1444 = vsel %vm586, %v1442, %v1430
    %v1445 = vsel %vm589, %v1443, %v1436
    %v1446 = vsel %vm589, %v1444, %v1438
    %v1447 = vpack.c.bf16 %v1446, %v1445
    %s1448 = scalar_lea.vmem %s6, 32
    %v1449 = vld [vmem:[%s1448] sm:$0xf]
    %v1450 = vld [vmem:[%s1448 + $0x4] sm:$0xf]
    %v1451 = vld [vmem:[%s1448 + $0x8] sm:$0xf]
    %v1452 = vld [vmem:[%s1448 + $0xc] sm:$0xf]
    %v1453 = vld [vmem:[%s1448 + $0x10] sm:$0xf]
    %v1454 = vld [vmem:[%s1448 + $0x14] sm:$0xf]
    %v1455 = vld [vmem:[%s1448 + $0x18] sm:$0xf]
    %v1456 = vld [vmem:[%s1448 + $0x1c] sm:$0xf]
    %v1465 = vunpack.c.l.b16 %v1449
    %v1466 = vunpack.c.l.b16 %v1450
    %v1467 = vunpack.c.l.b16 %v1451
    %v1468 = vunpack.c.l.b16 %v1452
    %v1469 = vunpack.c.l.b16 %v1453
    %v1470 = vunpack.c.l.b16 %v1454
    %v1471 = vunpack.c.l.b16 %v1455
    %v1472 = vunpack.c.l.b16 %v1456
    %v1473 = vpack.c.b16 %v1466, %v1465
    %v1474 = vpack.c.b16 %v1468, %v1467
    %v1475 = vpack.c.b16 %v1470, %v1469
    %v1476 = vpack.c.b16 %v1472, %v1471
    %v1482 = vsel %vm60, %v1447, 0
    %1484 = vmatprep.subr.bf16.mxu0 0
    %1485 = vmatpush1.bf16.msra.mxu0 %v1473
    %1486 = vmatprep.subr.bf16.mxu0 0
    %1487 = vmatpush1.bf16.msra.mxu0 %v1474
    %1488 = vmatprep.subr.bf16.mxu0 0
    %1489 = vmatpush1.bf16.msra.mxu0 %v1475
    %1490 = vmatprep.subr.bf16.mxu0 0
    %1491 = vmatpush1.bf16.msra.mxu0 %v1476
    %1492 = vmatprep.subr.bf16.mxu0 0
    %1493 = vmatpush1.bf16.msra.mxu0 0
    %1494 = vmatprep.subr.bf16.mxu0 0
    %1495 = vmatpush1.bf16.msra.mxu0 0
    %1496 = vmatprep.subr.bf16.mxu0 0
    %1497 = vmatpush1.bf16.msra.mxu0 0
    %1498 = vmatprep.subr.bf16.mxu0 0
    %1499 = vmatpush1.bf16.msra.mxu0 0
    %1500 = vmatprep.subr.bf16.mxu0 0
    %1501 = vmatpush1.bf16.msra.mxu0 0
    %1502 = vmatprep.subr.bf16.mxu0 0
    %1503 = vmatpush1.bf16.msra.mxu0 0
    %1504 = vmatprep.subr.bf16.mxu0 0
    %1505 = vmatpush1.bf16.msra.mxu0 0
    %1506 = vmatprep.subr.bf16.mxu0 0
    %1507 = vmatpush1.bf16.msra.mxu0 0
    %1508 = vmatprep.subr.bf16.mxu0 0
    %1509 = vmatpush1.bf16.msra.mxu0 0
    %1510 = vmatprep.subr.bf16.mxu0 0
    %1511 = vmatpush1.bf16.msra.mxu0 0
    %1512 = vmatprep.subr.bf16.mxu0 0
    %1513 = vmatpush1.bf16.msra.mxu0 0
    %1514 = vmatprep.subr.bf16.mxu0 0
    %1515 = vmatpush1.bf16.msra.mxu0 0
    %1516 = vmatprep.mubr.bf16.mxu0 0
    %1517 = vmatmul.mubr.bf16.gmra.mrb[0].mxu0 %v1482
    %v1518 = vpop.f32.mrb[0].mxu0
    %v1519 = vadd.f32 0.0, %v1518
    %v1520 = vpop.f32.mrb[0].mxu0
    %v1521 = vpop.f32.mrb[0].mxu0
    %v1522 = vadd.f32 0.0, %v1521
    %v1523 = vpop.f32.mrb[0].mxu0
    %1524 = vdwg.mxu0
    %v1525 = vadd.f32 %v913, %v1519
    %v1526 = vadd.f32 %v914, %v1522
    %s1527 = scalar_lea.vmem %s7, 1
    %v1528 = vld [vmem:[%s1527] sm:$0x1]
    %v1529 = vmul.f32 %v1525, %v1525
    %v1530 = vmul.f32 %v1526, %v1526
    %v1531 = vsel %vm60, %v1529, 0.0
    %1532 = vadd.xlane.f32.xlu0 %v1531
    %v1533 = vpop.xlane.xlu0 %1532
    %v1534 = vsel %vm60, %v1530, 0.0
    %1535 = vadd.xlane.f32.xlu0 %v1534
    %v1536 = vpop.xlane.xlu0 %1535
    %v1537 = vmul.f32 %v1533, %v67
    %v1538 = vmul.f32 %v1536, %v67
    %v1539 = vadd.f32 %v1537, 1e-06
    %v1540 = vadd.f32 %v1538, 1e-06
    %v1541 = vrsqrt.pop %v1539
    %v1542 = vrsqrt.pop %v1540
    %v1543 = vmul.f32 %v1525, %v1541
    %v1544 = vmul.f32 %v1526, %v1542
    %v1546 = vlaneseq
    %v1547 = vshrl.u32 %v1546, 7
    %v1548 = vsub.s32 0, %v1547
    %v1549 = vrot.slane %v1528, %v1548
    %v1551 = vmul.f32 %v1543, %v1549
    %v1552 = vmul.f32 %v1544, %v1549
    %v1553 = vpack.c.bf16 %v1552, %v1551
    %s1554 = scalar_lea.vmem %s8, 64
    %v1555 = vld [vmem:[%s1554] sm:$0xff]
    %v1556 = vld [vmem:[%s1554 + $0x8] sm:$0xff]
    %v1557 = vld [vmem:[%s1554 + $0x10] sm:$0xff]
    %v1558 = vld [vmem:[%s1554 + $0x18] sm:$0xff]
    %v1559 = vld [vmem:[%s1554 + $0x20] sm:$0xff]
    %v1560 = vld [vmem:[%s1554 + $0x28] sm:$0xff]
    %v1561 = vld [vmem:[%s1554 + $0x30] sm:$0xff]
    %v1562 = vld [vmem:[%s1554 + $0x38] sm:$0xff]
    %v1571 = vunpack.c.l.b16 %v1555
    %v1572 = vunpack.c.h.b16 %v1555
    %v1573 = vunpack.c.l.b16 %v1556
    %v1574 = vunpack.c.h.b16 %v1556
    %v1575 = vunpack.c.l.b16 %v1557
    %v1576 = vunpack.c.h.b16 %v1557
    %v1577 = vunpack.c.l.b16 %v1558
    %v1578 = vunpack.c.h.b16 %v1558
    %v1579 = vunpack.c.l.b16 %v1559
    %v1580 = vunpack.c.h.b16 %v1559
    %v1581 = vunpack.c.l.b16 %v1560
    %v1582 = vunpack.c.h.b16 %v1560
    %v1583 = vunpack.c.l.b16 %v1561
    %v1584 = vunpack.c.h.b16 %v1561
    %v1585 = vunpack.c.l.b16 %v1562
    %v1586 = vunpack.c.h.b16 %v1562
    %v1587 = vpack.c.b16 %v1573, %v1571
    %v1588 = vpack.c.b16 %v1574, %v1572
    %v1589 = vpack.c.b16 %v1577, %v1575
    %v1590 = vpack.c.b16 %v1578, %v1576
    %v1591 = vpack.c.b16 %v1581, %v1579
    %v1592 = vpack.c.b16 %v1582, %v1580
    %v1593 = vpack.c.b16 %v1585, %v1583
    %v1594 = vpack.c.b16 %v1586, %v1584
    %v1604 = vsel %vm60, %v1553, 0
    %1606 = vmatprep.subr.bf16.mxu0 %v1588
    %1607 = vmatpush1.bf16.msra.mxu0 %v1587
    %1608 = vmatprep.subr.bf16.mxu0 %v1590
    %1609 = vmatpush1.bf16.msra.mxu0 %v1589
    %1610 = vmatprep.subr.bf16.mxu0 %v1592
    %1611 = vmatpush1.bf16.msra.mxu0 %v1591
    %1612 = vmatprep.subr.bf16.mxu0 %v1594
    %1613 = vmatpush1.bf16.msra.mxu0 %v1593
    %1614 = vmatprep.subr.bf16.mxu0 0
    %1615 = vmatpush1.bf16.msra.mxu0 0
    %1616 = vmatprep.subr.bf16.mxu0 0
    %1617 = vmatpush1.bf16.msra.mxu0 0
    %1618 = vmatprep.subr.bf16.mxu0 0
    %1619 = vmatpush1.bf16.msra.mxu0 0
    %1620 = vmatprep.subr.bf16.mxu0 0
    %1621 = vmatpush1.bf16.msra.mxu0 0
    %1622 = vmatprep.subr.bf16.mxu0 0
    %1623 = vmatpush1.bf16.msra.mxu0 0
    %1624 = vmatprep.subr.bf16.mxu0 0
    %1625 = vmatpush1.bf16.msra.mxu0 0
    %1626 = vmatprep.subr.bf16.mxu0 0
    %1627 = vmatpush1.bf16.msra.mxu0 0
    %1628 = vmatprep.subr.bf16.mxu0 0
    %1629 = vmatpush1.bf16.msra.mxu0 0
    %1630 = vmatprep.subr.bf16.mxu0 0
    %1631 = vmatpush1.bf16.msra.mxu0 0
    %1632 = vmatprep.subr.bf16.mxu0 0
    %1633 = vmatpush1.bf16.msra.mxu0 0
    %1634 = vmatprep.subr.bf16.mxu0 0
    %1635 = vmatpush1.bf16.msra.mxu0 0
    %1636 = vmatprep.subr.bf16.mxu0 0
    %1637 = vmatpush1.bf16.msra.mxu0 0
    %1638 = vmatprep.mubr.bf16.mxu0 0
    %1639 = vmatmul.mubr.bf16.gmra.mrb[0].mxu0 %v1604
    %v1640 = vpop.f32.mrb[0].mxu0
    %v1641 = vadd.f32 0.0, %v1640
    %v1642 = vpop.f32.mrb[0].mxu0
    %v1643 = vadd.f32 0.0, %v1642
    %v1644 = vpop.f32.mrb[0].mxu0
    %v1645 = vadd.f32 0.0, %v1644
    %v1646 = vpop.f32.mrb[0].mxu0
    %v1647 = vadd.f32 0.0, %v1646
    %1648 = vdwg.mxu0
    %v1649 = vsub.f32 0.0, %v1641
    %v1650 = vsub.f32 0.0, %v1645
    %v1651 = vmul.f32 %v1649, 1.442695
    %v1652 = vpow.pop %v1651
    %v1653 = vmul.f32 %v1650, 1.442695
    %v1654 = vpow.pop %v1653
    %v1655 = vadd.f32 %v1652, 1.0
    %v1656 = vadd.f32 %v1654, 1.0
    %v1657 = vrcp.pop %v1655
    %v1658 = vmul.f32 1.0, %v1657
    %v1659 = vrcp.pop %v1656
    %v1660 = vmul.f32 1.0, %v1659
    %v1661 = vmul.f32 %v1641, %v1658
    %v1662 = vmul.f32 %v1645, %v1660
    %v1663 = vmul.f32 %v1661, %v1643
    %v1664 = vmul.f32 %v1662, %v1647
    %v1665 = vpack.c.bf16 %v1664, %v1663
    %s1666 = scalar_lea.vmem %s9, 64
    %v1667 = vld [vmem:[%s1666] sm:$0xf]
    %v1668 = vld [vmem:[%s1666 + $0x4] sm:$0xf]
    %v1669 = vld [vmem:[%s1666 + $0x8] sm:$0xf]
    %v1670 = vld [vmem:[%s1666 + $0xc] sm:$0xf]
    %v1671 = vld [vmem:[%s1666 + $0x10] sm:$0xf]
    %v1672 = vld [vmem:[%s1666 + $0x14] sm:$0xf]
    %v1673 = vld [vmem:[%s1666 + $0x18] sm:$0xf]
    %v1674 = vld [vmem:[%s1666 + $0x1c] sm:$0xf]
    %v1675 = vld [vmem:[%s1666 + $0x20] sm:$0xf]
    %v1676 = vld [vmem:[%s1666 + $0x24] sm:$0xf]
    %v1677 = vld [vmem:[%s1666 + $0x28] sm:$0xf]
    %v1678 = vld [vmem:[%s1666 + $0x2c] sm:$0xf]
    %v1679 = vld [vmem:[%s1666 + $0x30] sm:$0xf]
    %v1680 = vld [vmem:[%s1666 + $0x34] sm:$0xf]
    %v1681 = vld [vmem:[%s1666 + $0x38] sm:$0xf]
    %v1682 = vld [vmem:[%s1666 + $0x3c] sm:$0xf]
    %v1699 = vunpack.c.l.b16 %v1667
    %v1700 = vunpack.c.l.b16 %v1668
    %v1701 = vunpack.c.l.b16 %v1669
    %v1702 = vunpack.c.l.b16 %v1670
    %v1703 = vunpack.c.l.b16 %v1671
    %v1704 = vunpack.c.l.b16 %v1672
    %v1705 = vunpack.c.l.b16 %v1673
    %v1706 = vunpack.c.l.b16 %v1674
    %v1707 = vunpack.c.l.b16 %v1675
    %v1708 = vunpack.c.l.b16 %v1676
    %v1709 = vunpack.c.l.b16 %v1677
    %v1710 = vunpack.c.l.b16 %v1678
    %v1711 = vunpack.c.l.b16 %v1679
    %v1712 = vunpack.c.l.b16 %v1680
    %v1713 = vunpack.c.l.b16 %v1681
    %v1714 = vunpack.c.l.b16 %v1682
    %v1715 = vpack.c.b16 %v1700, %v1699
    %v1716 = vpack.c.b16 %v1702, %v1701
    %v1717 = vpack.c.b16 %v1704, %v1703
    %v1718 = vpack.c.b16 %v1706, %v1705
    %v1719 = vpack.c.b16 %v1708, %v1707
    %v1720 = vpack.c.b16 %v1710, %v1709
    %v1721 = vpack.c.b16 %v1712, %v1711
    %v1722 = vpack.c.b16 %v1714, %v1713
    %1731 = vmatprep.subr.bf16.mxu0 0
    %1732 = vmatpush1.bf16.msra.mxu0 %v1715
    %1733 = vmatprep.subr.bf16.mxu0 0
    %1734 = vmatpush1.bf16.msra.mxu0 %v1716
    %1735 = vmatprep.subr.bf16.mxu0 0
    %1736 = vmatpush1.bf16.msra.mxu0 %v1717
    %1737 = vmatprep.subr.bf16.mxu0 0
    %1738 = vmatpush1.bf16.msra.mxu0 %v1718
    %1739 = vmatprep.subr.bf16.mxu0 0
    %1740 = vmatpush1.bf16.msra.mxu0 %v1719
    %1741 = vmatprep.subr.bf16.mxu0 0
    %1742 = vmatpush1.bf16.msra.mxu0 %v1720
    %1743 = vmatprep.subr.bf16.mxu0 0
    %1744 = vmatpush1.bf16.msra.mxu0 %v1721
    %1745 = vmatprep.subr.bf16.mxu0 0
    %1746 = vmatpush1.bf16.msra.mxu0 %v1722
    %1747 = vmatprep.subr.bf16.mxu0 0
    %1748 = vmatpush1.bf16.msra.mxu0 0
    %1749 = vmatprep.subr.bf16.mxu0 0
    %1750 = vmatpush1.bf16.msra.mxu0 0
    %1751 = vmatprep.subr.bf16.mxu0 0
    %1752 = vmatpush1.bf16.msra.mxu0 0
    %1753 = vmatprep.subr.bf16.mxu0 0
    %1754 = vmatpush1.bf16.msra.mxu0 0
    %1755 = vmatprep.subr.bf16.mxu0 0
    %1756 = vmatpush1.bf16.msra.mxu0 0
    %1757 = vmatprep.subr.bf16.mxu0 0
    %1758 = vmatpush1.bf16.msra.mxu0 0
    %1759 = vmatprep.subr.bf16.mxu0 0
    %1760 = vmatpush1.bf16.msra.mxu0 0
    %1761 = vmatprep.subr.bf16.mxu0 0
    %1762 = vmatpush1.bf16.msra.mxu0 0
    %1763 = vmatprep.mubr.bf16.mxu0 0
    %1764 = vmatmul.mubr.bf16.gmra.mrb[0].mxu0 %v1665
    %v1765 = vpop.f32.mrb[0].mxu0
    %v1766 = vadd.f32 0.0, %v1765
    %v1767 = vpop.f32.mrb[0].mxu0
    %v1768 = vpop.f32.mrb[0].mxu0
    %v1769 = vadd.f32 0.0, %v1768
    %v1770 = vpop.f32.mrb[0].mxu0
    %1771 = vdwg.mxu0
    %v1772 = vadd.f32 %v1525, %v1766
    %v1773 = vadd.f32 %v1526, %v1769
    %v1774 = vld [vmem:[%s10] sm:$0x1]
    %v1775 = vmul.f32 %v1772, %v1772
    %v1776 = vmul.f32 %v1773, %v1773
    %v1777 = vsel %vm60, %v1775, 0.0
    %1778 = vadd.xlane.f32.xlu0 %v1777
    %v1779 = vpop.xlane.xlu0 %1778
    %v1780 = vsel %vm60, %v1776, 0.0
    %1781 = vadd.xlane.f32.xlu0 %v1780
    %v1782 = vpop.xlane.xlu0 %1781
    %v1783 = vmul.f32 %v1779, %v67
    %v1784 = vmul.f32 %v1782, %v67
    %v1785 = vadd.f32 %v1783, 1e-06
    %v1786 = vadd.f32 %v1784, 1e-06
    %v1787 = vrsqrt.pop %v1785
    %v1788 = vrsqrt.pop %v1786
    %v1789 = vmul.f32 %v1772, %v1787
    %v1790 = vmul.f32 %v1773, %v1788
    %v1792 = vlaneseq
    %v1793 = vshrl.u32 %v1792, 7
    %v1794 = vsub.s32 0, %v1793
    %v1795 = vrot.slane %v1774, %v1794
    %v1797 = vmul.f32 %v1789, %v1795
    %v1798 = vmul.f32 %v1790, %v1795
    %v1799 = vpack.c.bf16 %v1798, %v1797
    %v1800 = vld [vmem:[%s11] sm:$0xff]
    %v1801 = vld [vmem:[%s11 + $0x8] sm:$0xff]
    %v1802 = vld [vmem:[%s11 + $0x10] sm:$0xff]
    %v1803 = vld [vmem:[%s11 + $0x18] sm:$0xff]
    %v1804 = vld [vmem:[%s11 + $0x20] sm:$0xff]
    %v1805 = vld [vmem:[%s11 + $0x28] sm:$0xff]
    %v1806 = vld [vmem:[%s11 + $0x30] sm:$0xff]
    %v1807 = vld [vmem:[%s11 + $0x38] sm:$0xff]
    %v1816 = vunpack.c.l.b16 %v1800
    %v1817 = vunpack.c.h.b16 %v1800
    %v1818 = vunpack.c.l.b16 %v1801
    %v1819 = vunpack.c.h.b16 %v1801
    %v1820 = vunpack.c.l.b16 %v1802
    %v1821 = vunpack.c.h.b16 %v1802
    %v1822 = vunpack.c.l.b16 %v1803
    %v1823 = vunpack.c.h.b16 %v1803
    %v1824 = vunpack.c.l.b16 %v1804
    %v1825 = vunpack.c.h.b16 %v1804
    %v1826 = vunpack.c.l.b16 %v1805
    %v1827 = vunpack.c.h.b16 %v1805
    %v1828 = vunpack.c.l.b16 %v1806
    %v1829 = vunpack.c.h.b16 %v1806
    %v1830 = vunpack.c.l.b16 %v1807
    %v1831 = vunpack.c.h.b16 %v1807
    %v1832 = vpack.c.b16 %v1818, %v1816
    %v1833 = vpack.c.b16 %v1819, %v1817
    %v1834 = vpack.c.b16 %v1822, %v1820
    %v1835 = vpack.c.b16 %v1823, %v1821
    %v1836 = vpack.c.b16 %v1826, %v1824
    %v1837 = vpack.c.b16 %v1827, %v1825
    %v1838 = vpack.c.b16 %v1830, %v1828
    %v1839 = vpack.c.b16 %v1831, %v1829
    %v1849 = vsel %vm60, %v1799, 0
    %1851 = vmatprep.subr.bf16.mxu0 %v1833
    %1852 = vmatpush1.bf16.msra.mxu0 %v1832
    %1853 = vmatprep.subr.bf16.mxu0 %v1835
    %1854 = vmatpush1.bf16.msra.mxu0 %v1834
    %1855 = vmatprep.subr.bf16.mxu0 %v1837
    %1856 = vmatpush1.bf16.msra.mxu0 %v1836
    %1857 = vmatprep.subr.bf16.mxu0 %v1839
    %1858 = vmatpush1.bf16.msra.mxu0 %v1838
    %1859 = vmatprep.subr.bf16.mxu0 0
    %1860 = vmatpush1.bf16.msra.mxu0 0
    %1861 = vmatprep.subr.bf16.mxu0 0
    %1862 = vmatpush1.bf16.msra.mxu0 0
    %1863 = vmatprep.subr.bf16.mxu0 0
    %1864 = vmatpush1.bf16.msra.mxu0 0
    %1865 = vmatprep.subr.bf16.mxu0 0
    %1866 = vmatpush1.bf16.msra.mxu0 0
    %1867 = vmatprep.subr.bf16.mxu0 0
    %1868 = vmatpush1.bf16.msra.mxu0 0
    %1869 = vmatprep.subr.bf16.mxu0 0
    %1870 = vmatpush1.bf16.msra.mxu0 0
    %1871 = vmatprep.subr.bf16.mxu0 0
    %1872 = vmatpush1.bf16.msra.mxu0 0
    %1873 = vmatprep.subr.bf16.mxu0 0
    %1874 = vmatpush1.bf16.msra.mxu0 0
    %1875 = vmatprep.subr.bf16.mxu0 0
    %1876 = vmatpush1.bf16.msra.mxu0 0
    %1877 = vmatprep.subr.bf16.mxu0 0
    %1878 = vmatpush1.bf16.msra.mxu0 0
    %1879 = vmatprep.subr.bf16.mxu0 0
    %1880 = vmatpush1.bf16.msra.mxu0 0
    %1881 = vmatprep.subr.bf16.mxu0 0
    %1882 = vmatpush1.bf16.msra.mxu0 0
    %1883 = vmatprep.mubr.bf16.mxu0 0
    %1884 = vmatmul.mubr.bf16.gmra.mrb[0].mxu0 %v1849
    %v1885 = vpop.f32.mrb[0].mxu0
    %v1886 = vadd.f32 0.0, %v1885
    %v1887 = vpop.f32.mrb[0].mxu0
    %v1888 = vadd.f32 0.0, %v1887
    %v1889 = vpop.f32.mrb[0].mxu0
    %v1890 = vadd.f32 0.0, %v1889
    %v1891 = vpop.f32.mrb[0].mxu0
    %v1892 = vadd.f32 0.0, %v1891
    %1893 = vdwg.mxu0
    %1894 = vst [vmem:[#allocation2] sm:$0xff] %v1886
    %1895 = vst [vmem:[#allocation2 + $0x8] sm:$0xff] %v1888
    %1896 = vst [vmem:[#allocation2 + $0x10] sm:$0xff] %v1890
    %1897 = vst [vmem:[#allocation2 + $0x18] sm:$0xff] %v1892
    // Predicated region
    $region50: #{llama_forward_pallas.1} parent=1 // pred_check
      _
    $region51: #{llama_forward_pallas.1} parent=1 // pred_check_branch
      %1899 = sbr.rel (0) target = $region53
    $region52: #{llama_forward_pallas.1} parent=1 // pred_region
      %s1901 = ssub.s32 512, 512
      %1902 = vsyncadd [#allocation3], %s1901
      %s1903 = sshll.u32 [#allocation2], 4
      %s1904 = int_to_ptr.vmem [resolvable:$true] %s1903
      %1909 = dma.vmem_to_hbm [thread:$0]  %s1904, 512, %s12, [#allocation3], 256, 256, 16
    $region53: #{llama_forward_pallas.1} parent=1 // pred_fallthru
      _
    // Predicated region
    $region54: #{llama_forward_pallas.1} parent=1 // pred_check
      _
    $region55: #{llama_forward_pallas.1} parent=1 // pred_check_branch
      %1911 = sbr.rel (0) target = $region57
    $region56: #{llama_forward_pallas.1} parent=1 // pred_region
      %1912 = dma.done [#allocation3], 512
    $region57: #{llama_forward_pallas.1} parent=1 // pred_fallthru
      _
    %1913 = vsyncpa [#allocation3], 1

</llo_original>
